<compile_context>
chip_gen: v7x
topology: tpu7x:2x2x1
jax: 0.10.0
libtpu: 0.0.40
codegen_flags: <defaults>
</compile_context>

<pallas_src>
import functools
import math

import jax
import jax.numpy as jnp
from jax import lax
from jax.experimental import pallas as pl
from jax.experimental.pallas import tpu as pltpu


def _lstm_kernel(gx_ref, bias_ref, whh_ref, h0_ref, c0_ref,   # inputs
                 y_ref, hn_ref, cn_ref,                        # outputs
                 h_sc, c_sc,                                   # VMEM scratch
                 *, tt: int, bt: int, hidden: int, unroll: int,
                 approx_recip: bool):
    """One grid step processes `tt` consecutive timesteps of one batch tile."""
    t_chunk = pl.program_id(1)

    @pl.when(t_chunk == 0)
    def _init():
        h_sc[...] = h0_ref[...]
        c_sc[...] = c0_ref[...]

    # (H, 4H) bf16 recurrent weights: constant index_map + Buffered(1) -> DMA'd
    # once and VMEM-resident for the whole sequence.
    w = whh_ref[...]
    # Combined f32 bias; broadcast hoisted out of the timestep loop.
    bias = jnp.broadcast_to(bias_ref[...], (bt, 4 * hidden))

    def _sigmoid(v):
        if approx_recip:
            # exp + approximate reciprocal both issue on the (otherwise idle)
            # EUP slot next to the MXU/VPU work on the serial chain.
            return pl.reciprocal(1.0 + jnp.exp(-v), approx=True)
        return jax.nn.sigmoid(v)

    def step(s, carry):
        h, c = carry                                   # f32, vreg-resident state
        # Recurrent matmul: bf16 operands, f32 accumulation on the MXU.
        # TODO(synk): hold W_hh stationary across timesteps via
        # pltpu.matmul_push_rhs / matmul_acc_lhs / matmul_pop (or verify in the
        # bundle dump that Mosaic hoists the RHS push out of the unrolled loop).
        gates = (gx_ref[s].astype(jnp.float32) + bias
                 + jnp.dot(h.astype(w.dtype), w,
                           preferred_element_type=jnp.float32))   # (bt, 4H)
        # Permuted gate order [i, f, o, g]: one sigmoid over contiguous 3H.
        sig = _sigmoid(gates[:, :3 * hidden])
        i = sig[:, 0 * hidden:1 * hidden]
        f = sig[:, 1 * hidden:2 * hidden]
        o = sig[:, 2 * hidden:3 * hidden]
        g = jnp.tanh(gates[:, 3 * hidden:])
        c_new = f * c + i * g                          # f32 cell state
        h_new = o * jnp.tanh(c_new)
        y_ref[s] = h_new.astype(y_ref.dtype)           # row of (tt, bt, H) slab
        return (h_new, c_new)

    h_fin, c_fin = lax.fori_loop(0, tt, step, (h_sc[...], c_sc[...]),
                                 unroll=unroll)
    # One scratch round-trip per chunk (not per timestep).
    h_sc[...] = h_fin
    c_sc[...] = c_fin

    @pl.when(t_chunk == pl.num_programs(1) - 1)
    def _finalize():
        hn_ref[...] = h_fin.astype(hn_ref.dtype)
        cn_ref[...] = c_fin.astype(cn_ref.dtype)


def _auto_time_tile(T, bt, four_h, hidden, out_bytes, budget_bytes):
    """Largest divisor of T whose double-buffered streamed chunk fits budget."""
    per_step = 2 * bt * four_h * 2 + 2 * bt * hidden * out_bytes   # gx(bf16)+y
    cap = max(1, min(T, 128, budget_bytes // max(per_step, 1)))
    for d in range(cap, 0, -1):
        if T % d == 0:
            return d
    return 1


def lstm_forward(x, weight_ih, weight_hh, bias_ih, bias_hh, hx=None, *,
                 time_tile=None, batch_tile=None, unroll=None,
                 approx_recip=True, matmul_dtype=jnp.bfloat16,
                 stream_vmem_budget_bytes=6 << 20):
    """Single-layer, unidirectional torch.nn.LSTM forward (bias=True,
    batch_first=False).

      x:          (T, B, input_size)   time-major
      weight_ih:  (4H, input_size)     PyTorch gate order [i, f, g, o]
      weight_hh:  (4H, H)
      bias_ih, bias_hh: (4H,)
      hx: optional (h0, c0), each (B, H) or (1, B, H)

    Returns: y (T, B, H), (h_n (1, B, H), c_n (1, B, H))  -- in x.dtype.
    """
    T, B, _ = x.shape
    four_h = weight_ih.shape[0]
    H = four_h // 4

    if hx is None:
        h0 = jnp.zeros((B, H), jnp.float32)
        c0 = jnp.zeros((B, H), jnp.float32)
    else:
        h0 = hx[0].reshape(B, H).astype(jnp.float32)
        c0 = hx[1].reshape(B, H).astype(jnp.float32)

    # Permute gates [i, f, g, o] -> [i, f, o, g] so the three sigmoid gates are
    # one contiguous slice inside the kernel (lane-aligned when H % 128 == 0).
    perm = jnp.concatenate([jnp.arange(0, H), jnp.arange(H, 2 * H),
                            jnp.arange(3 * H, 4 * H), jnp.arange(2 * H, 3 * H)])
    w_ih_p = weight_ih[perm]                                         # (4H, I)
    w_hh_p = weight_hh[perm]                                         # (4H, H)
    bias_p = (bias_ih + bias_hh)[perm].astype(jnp.float32).reshape(1, four_h)

    # Hoisted input projection: one large parallel matmul, bf16 operands / f32
    # accumulation on the MXU; gates_x streamed to the kernel in bf16. The f32
    # bias is added inside the kernel.
    gates_x = jnp.dot(
        x.reshape(T * B, -1).astype(matmul_dtype),
        w_ih_p.T.astype(matmul_dtype),
        preferred_element_type=jnp.float32,
    ).astype(matmul_dtype).reshape(T, B, four_h)
    # TODO(synk): on v5e (lowest HBM BW) fuse this projection into the kernel
    # per chunk instead of round-tripping gates_x through HBM.

    # Recurrent weights: pre-transposed, bf16, VMEM-resident (single-buffered).
    w_hh_t = w_hh_p.T.astype(matmul_dtype)                           # (H, 4H)

    bt = B if batch_tile is None else batch_tile
    assert B % bt == 0, "batch_tile must divide B"
    out_bytes = jnp.dtype(x.dtype).itemsize
    if time_tile is None:
        time_tile = _auto_time_tile(T, bt, four_h, H, out_bytes,
                                    stream_vmem_budget_bytes)
    tt = time_tile
    assert T % tt == 0, "time_tile must divide T"
    if unroll is None:
        unroll = min(tt, 8)   # partial unroll: LLO visibility w/o vreg spills

    # Explicit VMEM budget: streamed double-buffers + resident weight/bias/state.
    est = (2 * tt * bt * four_h * 2          # gx chunk (bf16) x2 buffers
           + 2 * tt * bt * H * out_bytes     # y chunk x2 buffers
           + H * four_h * 2                  # resident bf16 W_hh^T (Buffered(1))
           + four_h * 4                      # bias
           + 2 * 2 * bt * H * 4              # h0/c0
           + 2 * bt * H * 4)                 # f32 h/c scratch
    vmem_limit = int(min(64 << 20, max(16 << 20, 2 * est)))

    kernel = functools.partial(_lstm_kernel, tt=tt, bt=bt, hidden=H,
                               unroll=unroll, approx_recip=approx_recip)

    single = pl.Buffered(buffer_count=1)   # fetched once -> single-buffer

    y, h_n, c_n = pl.pallas_call(
        kernel,
        out_shape=(
            jax.ShapeDtypeStruct((T, B, H), x.dtype),
            jax.ShapeDtypeStruct((B, H), x.dtype),
            jax.ShapeDtypeStruct((B, H), x.dtype),
        ),
        grid_spec=pltpu.PrefetchScalarGridSpec(
            num_scalar_prefetch=0,
            grid=(B // bt, T // tt),
            in_specs=[
                # streamed bf16 (tt, bt, 4H) chunk of precomputed input gates
                pl.BlockSpec((tt, bt, four_h), lambda b, t: (t, b, 0)),
                # combined f32 bias: constant index, single-buffered
                pl.BlockSpec((1, four_h), lambda b, t: (0, 0),
                             pipeline_mode=single),
                # recurrent weights: constant index, single-buffered, resident
                pl.BlockSpec((H, four_h), lambda b, t: (0, 0),
                             pipeline_mode=single),
                pl.BlockSpec((bt, H), lambda b, t: (b, 0),
                             pipeline_mode=single),
                pl.BlockSpec((bt, H), lambda b, t: (b, 0),
                             pipeline_mode=single),
            ],
            out_specs=(
                # lane-dense (tt, bt, H) output slab per grid step
                pl.BlockSpec((tt, bt, H), lambda b, t: (t, b, 0)),
                pl.BlockSpec((bt, H), lambda b, t: (b, 0)),
                pl.BlockSpec((bt, H), lambda b, t: (b, 0)),
            ),
            scratch_shapes=[
                pltpu.VMEM((bt, H), jnp.float32),   # h state across time chunks
                pltpu.VMEM((bt, H), jnp.float32),   # c state across time chunks
            ],
        ),
        compiler_params=pltpu.CompilerParams(
            # batch axis may use the 2nd TensorCore (v7x); time axis carries
            # state in scratch -> 'arbitrary'.
            dimension_semantics=("parallel", "arbitrary"),
            vmem_limit_bytes=vmem_limit,
        ),
    )(gates_x, bias_p, w_hh_t, h0, c0)

    # TODO(synk): num_layers>1, bidirectional, proj_size>0, dropout (training)
    # and PackedSequence/batch_sizes handling of torch.nn.LSTM not implemented.
    return y, (h_n[None], c_n[None])


def _lstm_ref(x, weight_ih, weight_hh, bias_ih, bias_hh, h0, c0):
    """Pure-JAX reference matching torch.nn.LSTM semantics."""
    H = h0.shape[-1]

    def step(carry, x_t):
        h, c = carry
        gates = x_t @ weight_ih.T + bias_ih + h @ weight_hh.T + bias_hh
        i = jax.nn.sigmoid(gates[:, 0 * H:1 * H])
        f = jax.nn.sigmoid(gates[:, 1 * H:2 * H])
        g = jnp.tanh(gates[:, 2 * H:3 * H])
        o = jax.nn.sigmoid(gates[:, 3 * H:4 * H])
        c = f * c + i * g
        h = o * jnp.tanh(c)
        return (h, c), h

    (h_n, c_n), ys = lax.scan(step, (h0, c0), x)
    return ys, h_n, c_n


if __name__ == "__main__":
    # Small, lane-friendly shapes: seq=32, batch=8, input=64, hidden=128.
    T, B, I, H = 32, 8, 64, 128
    key = jax.random.PRNGKey(0)
    kx, k1, k2, k3, k4 = jax.random.split(key, 5)
    bound = 1.0 / math.sqrt(H)
    x = jax.random.normal(kx, (T, B, I), jnp.float32)
    weight_ih = jax.random.uniform(k1, (4 * H, I), jnp.float32, -bound, bound)
    weight_hh = jax.random.uniform(k2, (4 * H, H), jnp.float32, -bound, bound)
    bias_ih = jax.random.uniform(k3, (4 * H,), jnp.float32, -bound, bound)
    bias_hh = jax.random.uniform(k4, (4 * H,), jnp.float32, -bound, bound)

    fwd = jax.jit(functools.partial(lstm_forward, time_tile=8))
    y, (h_n, c_n) = fwd(x, weight_ih, weight_hh, bias_ih, bias_hh)
    jax.block_until_ready((y, h_n, c_n))

    # Sanity check against a pure-JAX reference (loose tol: bf16 gates_x + bf16
    # recurrent matmul + approximate reciprocal in sigmoid; f32 state).
    h0 = jnp.zeros((B, H), jnp.float32)
    c0 = jnp.zeros((B, H), jnp.float32)
    y_ref, h_ref, c_ref = _lstm_ref(x, weight_ih, weight_hh, bias_ih, bias_hh,
                                    h0, c0)
    err = max(float(jnp.max(jnp.abs(y - y_ref))),
              float(jnp.max(jnp.abs(h_n[0] - h_ref))),
              float(jnp.max(jnp.abs(c_n[0] - c_ref))))
    assert err < 0.1, f"max abs error {err} too large"
    print("KERNEL_OK")
</pallas_src>

<mosaic_0001>
module attributes {stable_mosaic.version = 11 : i64} {
  func.func @_lstm_kernel(%arg0: i32, %arg1: i32, %arg2: memref<8x8x512xbf16, #tpu.memory_space<vmem>>, %arg3: memref<1x512xf32, #tpu.memory_space<vmem>>, %arg4: memref<128x512xbf16, #tpu.memory_space<vmem>>, %arg5: memref<8x128xf32, #tpu.memory_space<vmem>>, %arg6: memref<8x128xf32, #tpu.memory_space<vmem>>, %arg7: memref<8x8x128xf32, #tpu.memory_space<vmem>>, %arg8: memref<8x128xf32, #tpu.memory_space<vmem>>, %arg9: memref<8x128xf32, #tpu.memory_space<vmem>>, %arg10: memref<8x128xf32, #tpu.memory_space<vmem>>, %arg11: memref<8x128xf32, #tpu.memory_space<vmem>>) attributes {dimension_semantics = [#tpu.dimension_semantics<parallel>, #tpu.dimension_semantics<arbitrary>], iteration_bounds = array<i64: 1, 4>, scalar_prefetch = 0 : i64, scratch_operands = 2 : i64, tpu.core_type = #tpu.core_type<tc>, window_params = [{transform_indices = @transform_0, window_bounds = array<i64: 8, 8, 512>}, {pipeline_mode = #tpu.pipeline_mode<synchronous>, transform_indices = @transform_1, window_bounds = array<i64: 1, 512>}, {pipeline_mode = #tpu.pipeline_mode<synchronous>, transform_indices = @transform_2, window_bounds = array<i64: 128, 512>}, {pipeline_mode = #tpu.pipeline_mode<synchronous>, transform_indices = @transform_3, window_bounds = array<i64: 8, 128>}, {pipeline_mode = #tpu.pipeline_mode<synchronous>, transform_indices = @transform_4, window_bounds = array<i64: 8, 128>}, {transform_indices = @transform_5, window_bounds = array<i64: 8, 8, 128>}, {transform_indices = @transform_6, window_bounds = array<i64: 8, 128>}, {transform_indices = @transform_7, window_bounds = array<i64: 8, 128>}]} {
    %c0_i32 = arith.constant 0 : i32
    %0 = arith.cmpi eq, %arg1, %c0_i32 : i32
    %1 = arith.extui %0 : i1 to i32
    %c0_i32_0 = arith.constant 0 : i32
    %2 = arith.cmpi ne, %1, %c0_i32_0 : i32
    scf.if %2 {
      %c0_70 = arith.constant 0 : index
      %c0_71 = arith.constant 0 : index
      %246 = vector.load %arg5[%c0_70, %c0_71] : memref<8x128xf32, #tpu.memory_space<vmem>>, vector<8x128xf32>
      %c0_72 = arith.constant 0 : index
      %c0_73 = arith.constant 0 : index
      %247 = vector.load %arg10[%c0_72, %c0_73] : memref<8x128xf32, #tpu.memory_space<vmem>>, vector<8x128xf32>
      tpu.vector_store %arg10[%c0_72, %c0_73], %246 {strides = array<i32>} : memref<8x128xf32, #tpu.memory_space<vmem>>, vector<8x128xf32>,
      %c0_74 = arith.constant 0 : index
      %c0_75 = arith.constant 0 : index
      %248 = vector.load %arg6[%c0_74, %c0_75] : memref<8x128xf32, #tpu.memory_space<vmem>>, vector<8x128xf32>
      %c0_76 = arith.constant 0 : index
      %c0_77 = arith.constant 0 : index
      %249 = vector.load %arg11[%c0_76, %c0_77] : memref<8x128xf32, #tpu.memory_space<vmem>>, vector<8x128xf32>
      tpu.vector_store %arg11[%c0_76, %c0_77], %248 {strides = array<i32>} : memref<8x128xf32, #tpu.memory_space<vmem>>, vector<8x128xf32>,
    } else {
    }
    %c0 = arith.constant 0 : index
    %c0_1 = arith.constant 0 : index
    %3 = vector.load %arg4[%c0, %c0_1] : memref<128x512xbf16, #tpu.memory_space<vmem>>, vector<128x512xbf16>
    %c0_2 = arith.constant 0 : index
    %c0_3 = arith.constant 0 : index
    %4 = vector.load %arg3[%c0_2, %c0_3] : memref<1x512xf32, #tpu.memory_space<vmem>>, vector<1x512xf32>
    %5 = vector.shape_cast %4 : vector<1x512xf32> to vector<1x512xf32>
    %6 = vector.broadcast %5 : vector<1x512xf32> to vector<8x512xf32>
    %c0_4 = arith.constant 0 : index
    %c0_5 = arith.constant 0 : index
    %7 = vector.load %arg10[%c0_4, %c0_5] : memref<8x128xf32, #tpu.memory_space<vmem>>, vector<8x128xf32>
    %c0_6 = arith.constant 0 : index
    %c0_7 = arith.constant 0 : index
    %8 = vector.load %arg11[%c0_6, %c0_7] : memref<8x128xf32, #tpu.memory_space<vmem>>, vector<8x128xf32>
    %c0_i32_8 = arith.constant 0 : i32
    %9 = arith.index_cast %c0_i32_8 : i32 to index
    %c0_9 = arith.constant 0 : index
    %c0_10 = arith.constant 0 : index
    %10 = vector.load %arg2[%9, %c0_9, %c0_10] : memref<8x8x512xbf16, #tpu.memory_space<vmem>>, vector<1x8x512xbf16>
    %11 = vector.shape_cast %10 : vector<1x8x512xbf16> to vector<8x512xbf16>
    %12 = arith.extf %11 : vector<8x512xbf16> to vector<8x512xf32>
    %13 = arith.addf %12, %6 : vector<8x512xf32>
    %14 = arith.truncf %7 : vector<8x128xf32> to vector<8x128xbf16>
    %cst = arith.constant dense<0.000000e+00> : vector<8x512xf32>
    %15 = tpu.matmul %14, %3, %cst {dimension_numbers = #tpu.dot_dimension_numbers<[1], [0], [0], [1], [0, 0, 1, 1], [], []>} : vector<8x128xbf16>, vector<128x512xbf16>, vector<8x512xf32> -> vector<8x512xf32>
    %16 = arith.addf %13, %15 : vector<8x512xf32>
    %17 = vector.extract_strided_slice %16 {offsets = [0, 0], sizes = [8, 384], strides = [1, 1]} : vector<8x512xf32> to vector<8x384xf32>
    %cst_11 = arith.constant 0.000000e+00 : f32
    %18 = vector.broadcast %cst_11 : f32 to vector<8x384xf32>
    %19 = arith.subf %18, %17 : vector<8x384xf32>
    %20 = math.exp %19 : vector<8x384xf32>
    %cst_12 = arith.constant 1.000000e+00 : f32
    %21 = vector.broadcast %cst_12 : f32 to vector<8x384xf32>
    %22 = arith.addf %21, %20 : vector<8x384xf32>
    %23 = tpu.reciprocal %22 {approx = true} : vector<8x384xf32> -> vector<8x384xf32>
    %24 = vector.extract_strided_slice %23 {offsets = [0, 0], sizes = [8, 128], strides = [1, 1]} : vector<8x384xf32> to vector<8x128xf32>
    %25 = vector.extract_strided_slice %23 {offsets = [0, 128], sizes = [8, 128], strides = [1, 1]} : vector<8x384xf32> to vector<8x128xf32>
    %26 = vector.extract_strided_slice %23 {offsets = [0, 256], sizes = [8, 128], strides = [1, 1]} : vector<8x384xf32> to vector<8x128xf32>
    %27 = vector.extract_strided_slice %16 {offsets = [0, 384], sizes = [8, 128], strides = [1, 1]} : vector<8x512xf32> to vector<8x128xf32>
    %28 = math.tanh %27 : vector<8x128xf32>
    %29 = arith.mulf %25, %8 : vector<8x128xf32>
    %30 = arith.mulf %24, %28 : vector<8x128xf32>
    %31 = arith.addf %29, %30 : vector<8x128xf32>
    %32 = math.tanh %31 : vector<8x128xf32>
    %33 = arith.mulf %26, %32 : vector<8x128xf32>
    %34 = arith.index_cast %c0_i32_8 : i32 to index
    %c0_13 = arith.constant 0 : index
    %c0_14 = arith.constant 0 : index
    %35 = vector.load %arg7[%34, %c0_13, %c0_14] : memref<8x8x128xf32, #tpu.memory_space<vmem>>, vector<1x8x128xf32>
    %36 = vector.shape_cast %35 : vector<1x8x128xf32> to vector<8x128xf32>
    %37 = vector.shape_cast %33 : vector<8x128xf32> to vector<1x8x128xf32>
    tpu.vector_store %arg7[%34, %c0_13, %c0_14], %37 {strides = array<i32>} : memref<8x8x128xf32, #tpu.memory_space<vmem>>, vector<1x8x128xf32>,
    %c1_i32 = arith.constant 1 : i32
    %38 = arith.index_cast %c1_i32 : i32 to index
    %c0_15 = arith.constant 0 : index
    %c0_16 = arith.constant 0 : index
    %39 = vector.load %arg2[%38, %c0_15, %c0_16] : memref<8x8x512xbf16, #tpu.memory_space<vmem>>, vector<1x8x512xbf16>
    %40 = vector.shape_cast %39 : vector<1x8x512xbf16> to vector<8x512xbf16>
    %41 = arith.extf %40 : vector<8x512xbf16> to vector<8x512xf32>
    %42 = arith.addf %41, %6 : vector<8x512xf32>
    %43 = arith.truncf %33 : vector<8x128xf32> to vector<8x128xbf16>
    %cst_17 = arith.constant dense<0.000000e+00> : vector<8x512xf32>
    %44 = tpu.matmul %43, %3, %cst_17 {dimension_numbers = #tpu.dot_dimension_numbers<[1], [0], [0], [1], [0, 0, 1, 1], [], []>} : vector<8x128xbf16>, vector<128x512xbf16>, vector<8x512xf32> -> vector<8x512xf32>
    %45 = arith.addf %42, %44 : vector<8x512xf32>
    %46 = vector.extract_strided_slice %45 {offsets = [0, 0], sizes = [8, 384], strides = [1, 1]} : vector<8x512xf32> to vector<8x384xf32>
    %cst_18 = arith.constant 0.000000e+00 : f32
    %47 = vector.broadcast %cst_18 : f32 to vector<8x384xf32>
    %48 = arith.subf %47, %46 : vector<8x384xf32>
    %49 = math.exp %48 : vector<8x384xf32>
    %cst_19 = arith.constant 1.000000e+00 : f32
    %50 = vector.broadcast %cst_19 : f32 to vector<8x384xf32>
    %51 = arith.addf %50, %49 : vector<8x384xf32>
    %52 = tpu.reciprocal %51 {approx = true} : vector<8x384xf32> -> vector<8x384xf32>
    %53 = vector.extract_strided_slice %52 {offsets = [0, 0], sizes = [8, 128], strides = [1, 1]} : vector<8x384xf32> to vector<8x128xf32>
    %54 = vector.extract_strided_slice %52 {offsets = [0, 128], sizes = [8, 128], strides = [1, 1]} : vector<8x384xf32> to vector<8x128xf32>
    %55 = vector.extract_strided_slice %52 {offsets = [0, 256], sizes = [8, 128], strides = [1, 1]} : vector<8x384xf32> to vector<8x128xf32>
    %56 = vector.extract_strided_slice %45 {offsets = [0, 384], sizes = [8, 128], strides = [1, 1]} : vector<8x512xf32> to vector<8x128xf32>
    %57 = math.tanh %56 : vector<8x128xf32>
    %58 = arith.mulf %54, %31 : vector<8x128xf32>
    %59 = arith.mulf %53, %57 : vector<8x128xf32>
    %60 = arith.addf %58, %59 : vector<8x128xf32>
    %61 = math.tanh %60 : vector<8x128xf32>
    %62 = arith.mulf %55, %61 : vector<8x128xf32>
    %63 = arith.index_cast %c1_i32 : i32 to index
    %c0_20 = arith.constant 0 : index
    %c0_21 = arith.constant 0 : index
    %64 = vector.load %arg7[%63, %c0_20, %c0_21] : memref<8x8x128xf32, #tpu.memory_space<vmem>>, vector<1x8x128xf32>
    %65 = vector.shape_cast %64 : vector<1x8x128xf32> to vector<8x128xf32>
    %66 = vector.shape_cast %62 : vector<8x128xf32> to vector<1x8x128xf32>
    tpu.vector_store %arg7[%63, %c0_20, %c0_21], %66 {strides = array<i32>} : memref<8x8x128xf32, #tpu.memory_space<vmem>>, vector<1x8x128xf32>,
    %c2_i32 = arith.constant 2 : i32
    %67 = arith.index_cast %c2_i32 : i32 to index
    %c0_22 = arith.constant 0 : index
    %c0_23 = arith.constant 0 : index
    %68 = vector.load %arg2[%67, %c0_22, %c0_23] : memref<8x8x512xbf16, #tpu.memory_space<vmem>>, vector<1x8x512xbf16>
    %69 = vector.shape_cast %68 : vector<1x8x512xbf16> to vector<8x512xbf16>
    %70 = arith.extf %69 : vector<8x512xbf16> to vector<8x512xf32>
    %71 = arith.addf %70, %6 : vector<8x512xf32>
    %72 = arith.truncf %62 : vector<8x128xf32> to vector<8x128xbf16>
    %cst_24 = arith.constant dense<0.000000e+00> : vector<8x512xf32>
    %73 = tpu.matmul %72, %3, %cst_24 {dimension_numbers = #tpu.dot_dimension_numbers<[1], [0], [0], [1], [0, 0, 1, 1], [], []>} : vector<8x128xbf16>, vector<128x512xbf16>, vector<8x512xf32> -> vector<8x512xf32>
    %74 = arith.addf %71, %73 : vector<8x512xf32>
    %75 = vector.extract_strided_slice %74 {offsets = [0, 0], sizes = [8, 384], strides = [1, 1]} : vector<8x512xf32> to vector<8x384xf32>
    %cst_25 = arith.constant 0.000000e+00 : f32
    %76 = vector.broadcast %cst_25 : f32 to vector<8x384xf32>
    %77 = arith.subf %76, %75 : vector<8x384xf32>
    %78 = math.exp %77 : vector<8x384xf32>
    %cst_26 = arith.constant 1.000000e+00 : f32
    %79 = vector.broadcast %cst_26 : f32 to vector<8x384xf32>
    %80 = arith.addf %79, %78 : vector<8x384xf32>
    %81 = tpu.reciprocal %80 {approx = true} : vector<8x384xf32> -> vector<8x384xf32>
    %82 = vector.extract_strided_slice %81 {offsets = [0, 0], sizes = [8, 128], strides = [1, 1]} : vector<8x384xf32> to vector<8x128xf32>
    %83 = vector.extract_strided_slice %81 {offsets = [0, 128], sizes = [8, 128], strides = [1, 1]} : vector<8x384xf32> to vector<8x128xf32>
    %84 = vector.extract_strided_slice %81 {offsets = [0, 256], sizes = [8, 128], strides = [1, 1]} : vector<8x384xf32> to vector<8x128xf32>
    %85 = vector.extract_strided_slice %74 {offsets = [0, 384], sizes = [8, 128], strides = [1, 1]} : vector<8x512xf32> to vector<8x128xf32>
    %86 = math.tanh %85 : vector<8x128xf32>
    %87 = arith.mulf %83, %60 : vector<8x128xf32>
    %88 = arith.mulf %82, %86 : vector<8x128xf32>
    %89 = arith.addf %87, %88 : vector<8x128xf32>
    %90 = math.tanh %89 : vector<8x128xf32>
    %91 = arith.mulf %84, %90 : vector<8x128xf32>
    %92 = arith.index_cast %c2_i32 : i32 to index
    %c0_27 = arith.constant 0 : index
    %c0_28 = arith.constant 0 : index
    %93 = vector.load %arg7[%92, %c0_27, %c0_28] : memref<8x8x128xf32, #tpu.memory_space<vmem>>, vector<1x8x128xf32>
    %94 = vector.shape_cast %93 : vector<1x8x128xf32> to vector<8x128xf32>
    %95 = vector.shape_cast %91 : vector<8x128xf32> to vector<1x8x128xf32>
    tpu.vector_store %arg7[%92, %c0_27, %c0_28], %95 {strides = array<i32>} : memref<8x8x128xf32, #tpu.memory_space<vmem>>, vector<1x8x128xf32>,
    %c3_i32 = arith.constant 3 : i32
    %96 = arith.index_cast %c3_i32 : i32 to index
    %c0_29 = arith.constant 0 : index
    %c0_30 = arith.constant 0 : index
    %97 = vector.load %arg2[%96, %c0_29, %c0_30] : memref<8x8x512xbf16, #tpu.memory_space<vmem>>, vector<1x8x512xbf16>
    %98 = vector.shape_cast %97 : vector<1x8x512xbf16> to vector<8x512xbf16>
    %99 = arith.extf %98 : vector<8x512xbf16> to vector<8x512xf32>
    %100 = arith.addf %99, %6 : vector<8x512xf32>
    %101 = arith.truncf %91 : vector<8x128xf32> to vector<8x128xbf16>
    %cst_31 = arith.constant dense<0.000000e+00> : vector<8x512xf32>
    %102 = tpu.matmul %101, %3, %cst_31 {dimension_numbers = #tpu.dot_dimension_numbers<[1], [0], [0], [1], [0, 0, 1, 1], [], []>} : vector<8x128xbf16>, vector<128x512xbf16>, vector<8x512xf32> -> vector<8x512xf32>
    %103 = arith.addf %100, %102 : vector<8x512xf32>
    %104 = vector.extract_strided_slice %103 {offsets = [0, 0], sizes = [8, 384], strides = [1, 1]} : vector<8x512xf32> to vector<8x384xf32>
    %cst_32 = arith.constant 0.000000e+00 : f32
    %105 = vector.broadcast %cst_32 : f32 to vector<8x384xf32>
    %106 = arith.subf %105, %104 : vector<8x384xf32>
    %107 = math.exp %106 : vector<8x384xf32>
    %cst_33 = arith.constant 1.000000e+00 : f32
    %108 = vector.broadcast %cst_33 : f32 to vector<8x384xf32>
    %109 = arith.addf %108, %107 : vector<8x384xf32>
    %110 = tpu.reciprocal %109 {approx = true} : vector<8x384xf32> -> vector<8x384xf32>
    %111 = vector.extract_strided_slice %110 {offsets = [0, 0], sizes = [8, 128], strides = [1, 1]} : vector<8x384xf32> to vector<8x128xf32>
    %112 = vector.extract_strided_slice %110 {offsets = [0, 128], sizes = [8, 128], strides = [1, 1]} : vector<8x384xf32> to vector<8x128xf32>
    %113 = vector.extract_strided_slice %110 {offsets = [0, 256], sizes = [8, 128], strides = [1, 1]} : vector<8x384xf32> to vector<8x128xf32>
    %114 = vector.extract_strided_slice %103 {offsets = [0, 384], sizes = [8, 128], strides = [1, 1]} : vector<8x512xf32> to vector<8x128xf32>
    %115 = math.tanh %114 : vector<8x128xf32>
    %116 = arith.mulf %112, %89 : vector<8x128xf32>
    %117 = arith.mulf %111, %115 : vector<8x128xf32>
    %118 = arith.addf %116, %117 : vector<8x128xf32>
    %119 = math.tanh %118 : vector<8x128xf32>
    %120 = arith.mulf %113, %119 : vector<8x128xf32>
    %121 = arith.index_cast %c3_i32 : i32 to index
    %c0_34 = arith.constant 0 : index
    %c0_35 = arith.constant 0 : index
    %122 = vector.load %arg7[%121, %c0_34, %c0_35] : memref<8x8x128xf32, #tpu.memory_space<vmem>>, vector<1x8x128xf32>
    %123 = vector.shape_cast %122 : vector<1x8x128xf32> to vector<8x128xf32>
    %124 = vector.shape_cast %120 : vector<8x128xf32> to vector<1x8x128xf32>
    tpu.vector_store %arg7[%121, %c0_34, %c0_35], %124 {strides = array<i32>} : memref<8x8x128xf32, #tpu.memory_space<vmem>>, vector<1x8x128xf32>,
    %c4_i32 = arith.constant 4 : i32
    %125 = arith.index_cast %c4_i32 : i32 to index
    %c0_36 = arith.constant 0 : index
    %c0_37 = arith.constant 0 : index
    %126 = vector.load %arg2[%125, %c0_36, %c0_37] : memref<8x8x512xbf16, #tpu.memory_space<vmem>>, vector<1x8x512xbf16>
    %127 = vector.shape_cast %126 : vector<1x8x512xbf16> to vector<8x512xbf16>
    %128 = arith.extf %127 : vector<8x512xbf16> to vector<8x512xf32>
    %129 = arith.addf %128, %6 : vector<8x512xf32>
    %130 = arith.truncf %120 : vector<8x128xf32> to vector<8x128xbf16>
    %cst_38 = arith.constant dense<0.000000e+00> : vector<8x512xf32>
    %131 = tpu.matmul %130, %3, %cst_38 {dimension_numbers = #tpu.dot_dimension_numbers<[1], [0], [0], [1], [0, 0, 1, 1], [], []>} : vector<8x128xbf16>, vector<128x512xbf16>, vector<8x512xf32> -> vector<8x512xf32>
    %132 = arith.addf %129, %131 : vector<8x512xf32>
    %133 = vector.extract_strided_slice %132 {offsets = [0, 0], sizes = [8, 384], strides = [1, 1]} : vector<8x512xf32> to vector<8x384xf32>
    %cst_39 = arith.constant 0.000000e+00 : f32
    %134 = vector.broadcast %cst_39 : f32 to vector<8x384xf32>
    %135 = arith.subf %134, %133 : vector<8x384xf32>
    %136 = math.exp %135 : vector<8x384xf32>
    %cst_40 = arith.constant 1.000000e+00 : f32
    %137 = vector.broadcast %cst_40 : f32 to vector<8x384xf32>
    %138 = arith.addf %137, %136 : vector<8x384xf32>
    %139 = tpu.reciprocal %138 {approx = true} : vector<8x384xf32> -> vector<8x384xf32>
    %140 = vector.extract_strided_slice %139 {offsets = [0, 0], sizes = [8, 128], strides = [1, 1]} : vector<8x384xf32> to vector<8x128xf32>
    %141 = vector.extract_strided_slice %139 {offsets = [0, 128], sizes = [8, 128], strides = [1, 1]} : vector<8x384xf32> to vector<8x128xf32>
    %142 = vector.extract_strided_slice %139 {offsets = [0, 256], sizes = [8, 128], strides = [1, 1]} : vector<8x384xf32> to vector<8x128xf32>
    %143 = vector.extract_strided_slice %132 {offsets = [0, 384], sizes = [8, 128], strides = [1, 1]} : vector<8x512xf32> to vector<8x128xf32>
    %144 = math.tanh %143 : vector<8x128xf32>
    %145 = arith.mulf %141, %118 : vector<8x128xf32>
    %146 = arith.mulf %140, %144 : vector<8x128xf32>
    %147 = arith.addf %145, %146 : vector<8x128xf32>
    %148 = math.tanh %147 : vector<8x128xf32>
    %149 = arith.mulf %142, %148 : vector<8x128xf32>
    %150 = arith.index_cast %c4_i32 : i32 to index
    %c0_41 = arith.constant 0 : index
    %c0_42 = arith.constant 0 : index
    %151 = vector.load %arg7[%150, %c0_41, %c0_42] : memref<8x8x128xf32, #tpu.memory_space<vmem>>, vector<1x8x128xf32>
    %152 = vector.shape_cast %151 : vector<1x8x128xf32> to vector<8x128xf32>
    %153 = vector.shape_cast %149 : vector<8x128xf32> to vector<1x8x128xf32>
    tpu.vector_store %arg7[%150, %c0_41, %c0_42], %153 {strides = array<i32>} : memref<8x8x128xf32, #tpu.memory_space<vmem>>, vector<1x8x128xf32>,
    %c5_i32 = arith.constant 5 : i32
    %154 = arith.index_cast %c5_i32 : i32 to index
    %c0_43 = arith.constant 0 : index
    %c0_44 = arith.constant 0 : index
    %155 = vector.load %arg2[%154, %c0_43, %c0_44] : memref<8x8x512xbf16, #tpu.memory_space<vmem>>, vector<1x8x512xbf16>
    %156 = vector.shape_cast %155 : vector<1x8x512xbf16> to vector<8x512xbf16>
    %157 = arith.extf %156 : vector<8x512xbf16> to vector<8x512xf32>
    %158 = arith.addf %157, %6 : vector<8x512xf32>
    %159 = arith.truncf %149 : vector<8x128xf32> to vector<8x128xbf16>
    %cst_45 = arith.constant dense<0.000000e+00> : vector<8x512xf32>
    %160 = tpu.matmul %159, %3, %cst_45 {dimension_numbers = #tpu.dot_dimension_numbers<[1], [0], [0], [1], [0, 0, 1, 1], [], []>} : vector<8x128xbf16>, vector<128x512xbf16>, vector<8x512xf32> -> vector<8x512xf32>
    %161 = arith.addf %158, %160 : vector<8x512xf32>
    %162 = vector.extract_strided_slice %161 {offsets = [0, 0], sizes = [8, 384], strides = [1, 1]} : vector<8x512xf32> to vector<8x384xf32>
    %cst_46 = arith.constant 0.000000e+00 : f32
    %163 = vector.broadcast %cst_46 : f32 to vector<8x384xf32>
    %164 = arith.subf %163, %162 : vector<8x384xf32>
    %165 = math.exp %164 : vector<8x384xf32>
    %cst_47 = arith.constant 1.000000e+00 : f32
    %166 = vector.broadcast %cst_47 : f32 to vector<8x384xf32>
    %167 = arith.addf %166, %165 : vector<8x384xf32>
    %168 = tpu.reciprocal %167 {approx = true} : vector<8x384xf32> -> vector<8x384xf32>
    %169 = vector.extract_strided_slice %168 {offsets = [0, 0], sizes = [8, 128], strides = [1, 1]} : vector<8x384xf32> to vector<8x128xf32>
    %170 = vector.extract_strided_slice %168 {offsets = [0, 128], sizes = [8, 128], strides = [1, 1]} : vector<8x384xf32> to vector<8x128xf32>
    %171 = vector.extract_strided_slice %168 {offsets = [0, 256], sizes = [8, 128], strides = [1, 1]} : vector<8x384xf32> to vector<8x128xf32>
    %172 = vector.extract_strided_slice %161 {offsets = [0, 384], sizes = [8, 128], strides = [1, 1]} : vector<8x512xf32> to vector<8x128xf32>
    %173 = math.tanh %172 : vector<8x128xf32>
    %174 = arith.mulf %170, %147 : vector<8x128xf32>
    %175 = arith.mulf %169, %173 : vector<8x128xf32>
    %176 = arith.addf %174, %175 : vector<8x128xf32>
    %177 = math.tanh %176 : vector<8x128xf32>
    %178 = arith.mulf %171, %177 : vector<8x128xf32>
    %179 = arith.index_cast %c5_i32 : i32 to index
    %c0_48 = arith.constant 0 : index
    %c0_49 = arith.constant 0 : index
    %180 = vector.load %arg7[%179, %c0_48, %c0_49] : memref<8x8x128xf32, #tpu.memory_space<vmem>>, vector<1x8x128xf32>
    %181 = vector.shape_cast %180 : vector<1x8x128xf32> to vector<8x128xf32>
    %182 = vector.shape_cast %178 : vector<8x128xf32> to vector<1x8x128xf32>
    tpu.vector_store %arg7[%179, %c0_48, %c0_49], %182 {strides = array<i32>} : memref<8x8x128xf32, #tpu.memory_space<vmem>>, vector<1x8x128xf32>,
    %c6_i32 = arith.constant 6 : i32
    %183 = arith.index_cast %c6_i32 : i32 to index
    %c0_50 = arith.constant 0 : index
    %c0_51 = arith.constant 0 : index
    %184 = vector.load %arg2[%183, %c0_50, %c0_51] : memref<8x8x512xbf16, #tpu.memory_space<vmem>>, vector<1x8x512xbf16>
    %185 = vector.shape_cast %184 : vector<1x8x512xbf16> to vector<8x512xbf16>
    %186 = arith.extf %185 : vector<8x512xbf16> to vector<8x512xf32>
    %187 = arith.addf %186, %6 : vector<8x512xf32>
    %188 = arith.truncf %178 : vector<8x128xf32> to vector<8x128xbf16>
    %cst_52 = arith.constant dense<0.000000e+00> : vector<8x512xf32>
    %189 = tpu.matmul %188, %3, %cst_52 {dimension_numbers = #tpu.dot_dimension_numbers<[1], [0], [0], [1], [0, 0, 1, 1], [], []>} : vector<8x128xbf16>, vector<128x512xbf16>, vector<8x512xf32> -> vector<8x512xf32>
    %190 = arith.addf %187, %189 : vector<8x512xf32>
    %191 = vector.extract_strided_slice %190 {offsets = [0, 0], sizes = [8, 384], strides = [1, 1]} : vector<8x512xf32> to vector<8x384xf32>
    %cst_53 = arith.constant 0.000000e+00 : f32
    %192 = vector.broadcast %cst_53 : f32 to vector<8x384xf32>
    %193 = arith.subf %192, %191 : vector<8x384xf32>
    %194 = math.exp %193 : vector<8x384xf32>
    %cst_54 = arith.constant 1.000000e+00 : f32
    %195 = vector.broadcast %cst_54 : f32 to vector<8x384xf32>
    %196 = arith.addf %195, %194 : vector<8x384xf32>
    %197 = tpu.reciprocal %196 {approx = true} : vector<8x384xf32> -> vector<8x384xf32>
    %198 = vector.extract_strided_slice %197 {offsets = [0, 0], sizes = [8, 128], strides = [1, 1]} : vector<8x384xf32> to vector<8x128xf32>
    %199 = vector.extract_strided_slice %197 {offsets = [0, 128], sizes = [8, 128], strides = [1, 1]} : vector<8x384xf32> to vector<8x128xf32>
    %200 = vector.extract_strided_slice %197 {offsets = [0, 256], sizes = [8, 128], strides = [1, 1]} : vector<8x384xf32> to vector<8x128xf32>
    %201 = vector.extract_strided_slice %190 {offsets = [0, 384], sizes = [8, 128], strides = [1, 1]} : vector<8x512xf32> to vector<8x128xf32>
    %202 = math.tanh %201 : vector<8x128xf32>
    %203 = arith.mulf %199, %176 : vector<8x128xf32>
    %204 = arith.mulf %198, %202 : vector<8x128xf32>
    %205 = arith.addf %203, %204 : vector<8x128xf32>
    %206 = math.tanh %205 : vector<8x128xf32>
    %207 = arith.mulf %200, %206 : vector<8x128xf32>
    %208 = arith.index_cast %c6_i32 : i32 to index
    %c0_55 = arith.constant 0 : index
    %c0_56 = arith.constant 0 : index
    %209 = vector.load %arg7[%208, %c0_55, %c0_56] : memref<8x8x128xf32, #tpu.memory_space<vmem>>, vector<1x8x128xf32>
    %210 = vector.shape_cast %209 : vector<1x8x128xf32> to vector<8x128xf32>
    %211 = vector.shape_cast %207 : vector<8x128xf32> to vector<1x8x128xf32>
    tpu.vector_store %arg7[%208, %c0_55, %c0_56], %211 {strides = array<i32>} : memref<8x8x128xf32, #tpu.memory_space<vmem>>, vector<1x8x128xf32>,
    %c7_i32 = arith.constant 7 : i32
    %212 = arith.index_cast %c7_i32 : i32 to index
    %c0_57 = arith.constant 0 : index
    %c0_58 = arith.constant 0 : index
    %213 = vector.load %arg2[%212, %c0_57, %c0_58] : memref<8x8x512xbf16, #tpu.memory_space<vmem>>, vector<1x8x512xbf16>
    %214 = vector.shape_cast %213 : vector<1x8x512xbf16> to vector<8x512xbf16>
    %215 = arith.extf %214 : vector<8x512xbf16> to vector<8x512xf32>
    %216 = arith.addf %215, %6 : vector<8x512xf32>
    %217 = arith.truncf %207 : vector<8x128xf32> to vector<8x128xbf16>
    %cst_59 = arith.constant dense<0.000000e+00> : vector<8x512xf32>
    %218 = tpu.matmul %217, %3, %cst_59 {dimension_numbers = #tpu.dot_dimension_numbers<[1], [0], [0], [1], [0, 0, 1, 1], [], []>} : vector<8x128xbf16>, vector<128x512xbf16>, vector<8x512xf32> -> vector<8x512xf32>
    %219 = arith.addf %216, %218 : vector<8x512xf32>
    %220 = vector.extract_strided_slice %219 {offsets = [0, 0], sizes = [8, 384], strides = [1, 1]} : vector<8x512xf32> to vector<8x384xf32>
    %cst_60 = arith.constant 0.000000e+00 : f32
    %221 = vector.broadcast %cst_60 : f32 to vector<8x384xf32>
    %222 = arith.subf %221, %220 : vector<8x384xf32>
    %223 = math.exp %222 : vector<8x384xf32>
    %cst_61 = arith.constant 1.000000e+00 : f32
    %224 = vector.broadcast %cst_61 : f32 to vector<8x384xf32>
    %225 = arith.addf %224, %223 : vector<8x384xf32>
    %226 = tpu.reciprocal %225 {approx = true} : vector<8x384xf32> -> vector<8x384xf32>
    %227 = vector.extract_strided_slice %226 {offsets = [0, 0], sizes = [8, 128], strides = [1, 1]} : vector<8x384xf32> to vector<8x128xf32>
    %228 = vector.extract_strided_slice %226 {offsets = [0, 128], sizes = [8, 128], strides = [1, 1]} : vector<8x384xf32> to vector<8x128xf32>
    %229 = vector.extract_strided_slice %226 {offsets = [0, 256], sizes = [8, 128], strides = [1, 1]} : vector<8x384xf32> to vector<8x128xf32>
    %230 = vector.extract_strided_slice %219 {offsets = [0, 384], sizes = [8, 128], strides = [1, 1]} : vector<8x512xf32> to vector<8x128xf32>
    %231 = math.tanh %230 : vector<8x128xf32>
    %232 = arith.mulf %228, %205 : vector<8x128xf32>
    %233 = arith.mulf %227, %231 : vector<8x128xf32>
    %234 = arith.addf %232, %233 : vector<8x128xf32>
    %235 = math.tanh %234 : vector<8x128xf32>
    %236 = arith.mulf %229, %235 : vector<8x128xf32>
    %237 = arith.index_cast %c7_i32 : i32 to index
    %c0_62 = arith.constant 0 : index
    %c0_63 = arith.constant 0 : index
    %238 = vector.load %arg7[%237, %c0_62, %c0_63] : memref<8x8x128xf32, #tpu.memory_space<vmem>>, vector<1x8x128xf32>
    %239 = vector.shape_cast %238 : vector<1x8x128xf32> to vector<8x128xf32>
    %240 = vector.shape_cast %236 : vector<8x128xf32> to vector<1x8x128xf32>
    tpu.vector_store %arg7[%237, %c0_62, %c0_63], %240 {strides = array<i32>} : memref<8x8x128xf32, #tpu.memory_space<vmem>>, vector<1x8x128xf32>,
    %c8_i32 = arith.constant 8 : i32
    %c0_64 = arith.constant 0 : index
    %c0_65 = arith.constant 0 : index
    %241 = vector.load %arg10[%c0_64, %c0_65] : memref<8x128xf32, #tpu.memory_space<vmem>>, vector<8x128xf32>
    tpu.vector_store %arg10[%c0_64, %c0_65], %236 {strides = array<i32>} : memref<8x128xf32, #tpu.memory_space<vmem>>, vector<8x128xf32>,
    %c0_66 = arith.constant 0 : index
    %c0_67 = arith.constant 0 : index
    %242 = vector.load %arg11[%c0_66, %c0_67] : memref<8x128xf32, #tpu.memory_space<vmem>>, vector<8x128xf32>
    tpu.vector_store %arg11[%c0_66, %c0_67], %234 {strides = array<i32>} : memref<8x128xf32, #tpu.memory_space<vmem>>, vector<8x128xf32>,
    %c3_i32_68 = arith.constant 3 : i32
    %243 = arith.cmpi eq, %arg1, %c3_i32_68 : i32
    %244 = arith.extui %243 : i1 to i32
    %c0_i32_69 = arith.constant 0 : i32
    %245 = arith.cmpi ne, %244, %c0_i32_69 : i32
    scf.if %245 {
      %c0_70 = arith.constant 0 : index
      %c0_71 = arith.constant 0 : index
      %246 = vector.load %arg8[%c0_70, %c0_71] : memref<8x128xf32, #tpu.memory_space<vmem>>, vector<8x128xf32>
      tpu.vector_store %arg8[%c0_70, %c0_71], %236 {strides = array<i32>} : memref<8x128xf32, #tpu.memory_space<vmem>>, vector<8x128xf32>,
      %c0_72 = arith.constant 0 : index
      %c0_73 = arith.constant 0 : index
      %247 = vector.load %arg9[%c0_72, %c0_73] : memref<8x128xf32, #tpu.memory_space<vmem>>, vector<8x128xf32>
      tpu.vector_store %arg9[%c0_72, %c0_73], %234 {strides = array<i32>} : memref<8x128xf32, #tpu.memory_space<vmem>>, vector<8x128xf32>,
    } else {
    }
    return
  }
  func.func @transform_0(%arg0: i32, %arg1: i32) -> (i32, i32, i32) {
    %c0_i32 = arith.constant 0 : i32
    %c0_i32_0 = arith.constant 0 : i32
    return %arg1, %arg0, %c0_i32 : i32, i32, i32
  }
  func.func @transform_1(%arg0: i32, %arg1: i32) -> (i32, i32) {
    %c0_i32 = arith.constant 0 : i32
    %c0_i32_0 = arith.constant 0 : i32
    %c0_i32_1 = arith.constant 0 : i32
    return %c0_i32, %c0_i32_0 : i32, i32
  }
  func.func @transform_2(%arg0: i32, %arg1: i32) -> (i32, i32) {
    %c0_i32 = arith.constant 0 : i32
    %c0_i32_0 = arith.constant 0 : i32
    %c0_i32_1 = arith.constant 0 : i32
    return %c0_i32, %c0_i32_0 : i32, i32
  }
  func.func @transform_3(%arg0: i32, %arg1: i32) -> (i32, i32) {
    %c0_i32 = arith.constant 0 : i32
    %c0_i32_0 = arith.constant 0 : i32
    return %arg0, %c0_i32 : i32, i32
  }
  func.func @transform_4(%arg0: i32, %arg1: i32) -> (i32, i32) {
    %c0_i32 = arith.constant 0 : i32
    %c0_i32_0 = arith.constant 0 : i32
    return %arg0, %c0_i32 : i32, i32
  }
  func.func @transform_5(%arg0: i32, %arg1: i32) -> (i32, i32, i32) {
    %c0_i32 = arith.constant 0 : i32
    %c0_i32_0 = arith.constant 0 : i32
    return %arg1, %arg0, %c0_i32 : i32, i32, i32
  }
  func.func @transform_6(%arg0: i32, %arg1: i32) -> (i32, i32) {
    %c0_i32 = arith.constant 0 : i32
    %c0_i32_0 = arith.constant 0 : i32
    return %arg0, %c0_i32 : i32, i32
  }
  func.func @transform_7(%arg0: i32, %arg1: i32) -> (i32, i32) {
    %c0_i32 = arith.constant 0 : i32
    %c0_i32_0 = arith.constant 0 : i32
    return %arg0, %c0_i32 : i32, i32
  }
}

</mosaic_0001>

<llo_original>
// kernel: lstm_forward.1
$region0: #{lstm_forward.1}
  #allocation0 [shape = 'u32[]', space=smem, size = 0x4, offset = 0x4, fixed_abs, tag = 'smem constant byte address 0x4 - core index']
  #allocation1 [shape = 'u32[144,128]{1,0:T(1,128)}', space=vmem, size = 0x12000, scoped, tag = 'internal scratch']
  #allocation2 [shape = 'f32[8,128]{1,0:T(8,128)}', space=vmem, size = 0x1000, scoped, tag = 'scratch operand']
  #allocation3 [shape = 'f32[8,128]{1,0:T(8,128)}', space=vmem, size = 0x1000, scoped, tag = 'scratch operand']
  %s0 = inlined_call_operand.vmem [shape: bf16[32,8,512], index: 0, kind: input, shape index: {}]
  %s1 = inlined_call_operand.vmem [shape: f32[1,512], index: 1, kind: input, shape index: {}]
  %s2 = inlined_call_operand.vmem [shape: bf16[128,512], index: 2, kind: input, shape index: {}]
  %s3 = inlined_call_operand.vmem [shape: f32[8,128], index: 3, kind: input, shape index: {}, may-alias: {3,4}]
  %s4 = inlined_call_operand.vmem [shape: f32[8,128], index: 4, kind: input, shape index: {}, may-alias: {3,4}]
  %s5 = inlined_call_operand.hbm [shape: f32[32,8,128], index: 5, kind: output, shape index: {0}]
  %s6 = inlined_call_operand.hbm [shape: f32[8,128], index: 6, kind: output, shape index: {1}]
  %s7 = inlined_call_operand.hbm [shape: f32[8,128], index: 7, kind: output, shape index: {2}]
  %8 = xla_tuple %s5, %s6, %s7
  %s9 = sld [smem:[#allocation0]]
  $region77: #{lstm_forward.1} parent=0
    _
  %s11 = ssub.s32 1, %s9
  %s12 = scalar_select 0, %s11, %s9
  $region1: #{lstm_forward.1} parent=0
    #allocation4 [shape = 'u8[65536]{0}', space=vmem, size = 0x10000, scoped, tag = 'output window, operand 0']
    #allocation5 [shape = 's32[2]{0}', space=sflag, size = 0x8, scoped, tag = 'scoped memory for lstm_forward.1']
    #allocation6 [shape = 'u8[4096]{0}', space=vmem, size = 0x1000, scoped, tag = 'output window, operand 1, single buffered']
    #allocation7 [shape = 's32[1]{0}', space=sflag, size = 0x4, scoped, tag = 'scoped memory for lstm_forward.1']
    #allocation8 [shape = 'u8[4096]{0}', space=vmem, size = 0x1000, scoped, tag = 'output window, operand 2, single buffered']
    %13 = vsyncpa [#allocation5], 0
    %s14 = scalar_lea.sflag [#allocation5], 1
    %15 = vsyncpa %s14, 0
    %16 = vsyncpa [#allocation7], 0
    loop: start=0, step=1, limit=6
    $region2: #{lstm_forward.1} parent=1 // loop_pre_header
      _
    $region3: #{lstm_forward.1} parent=1 // loop_header
      %s18 = sphi 0, %s22
      %p19 = scmp.ge.s32.totalorder %s18, 6
      %s25 = sphi 0, %s37
      %s26 = sphi 0, %s33
      %s27 = sphi 0, %s25
      %s28 = sphi 0, %s26
      %s29 = sphi 0, %s27
      %s30 = sphi 0, %s28
      %s42 = sphi 0, %s44
      %s45 = sphi 0, %s42
      %s46 = sphi 0, %s45
      %s62 = sphi 0, %s46
      %s66 = sphi 0, %s66
      %s68 = sphi 0, %s66
      %s69 = sphi 0, %s68
      %s83 = sphi 0, %s69
      %s87 = sphi 0, %s87
      %s89 = sphi 0, %s87
      %s90 = sphi 0, %s89
      %s104 = sphi 0, %s90
      %s110 = sphi 0, %s112
      %s113 = sphi 0, %s110
      %s114 = sphi 0, %s113
      %s130 = sphi 0, %s114
      %s136 = sphi 0, %s138
      %s139 = sphi 0, %s136
      %s140 = sphi 0, %s139
      %s156 = sphi 0, %s140
      %s164 = sphi 0, %s166
      %s167 = sphi 0, %s164
      %s168 = sphi 0, %s167
      %s184 = sphi 0, %s168
      %s190 = sphi 0, %s192
      %s193 = sphi 0, %s190
      %s194 = sphi 0, %s193
      %s210 = sphi 0, %s194
      %s216 = sphi 0, %s218
      %s219 = sphi 0, %s216
      %s220 = sphi 0, %s219
      %s236 = sphi 0, %s220
    $region4: #{lstm_forward.1} parent=1 // loop_header_branch
      %21 = sbr.rel (%p19) target = $region8
    $region5: #{lstm_forward.1} parent=1 // loop_body
      %s23 = ssub.s32 %s18, 1
      %s24 = ssub.s32 %s18, 2
      %s31 = sadd.s32 1, %s26
      %p32 = scmp.ge.s32.totalorder %s31, 4
      %s33 = scalar_select %p32, 0, %s31
      %s34 = sadd.s32 1, %s25
      %s35 = scalar_select %p32, %s34, %s25
      %p36 = scmp.ge.s32.totalorder %s35, 1
      %s37 = scalar_select %p36, 0, %s35
      %s38 = ssub.s32 %s26, %s33
      %s39 = ssub.s32 %s25, %s37
      %s40 = sor.u32 %s38, %s39
      %p41 = scmp.eq.s32.totalorder %s40, 0
      %s43 = sadd.s32 %s42, 1
      %s44 = scalar_select %p41, %s42, %s43
      %p47 = pneg %p41
      %p48 = scmp.eq.s32.totalorder %s18, 3
      %p49 = por %p47, %p48
      %p50 = scmp.ne.s32.totalorder %s42, %s45
      %p51 = scmp.eq.s32.totalorder %s18, 0
      %p52 = por %p50, %p51
      %p53 = scmp.ne.s32.totalorder %s42, %s45
      %p54 = scmp.eq.s32.totalorder %s23, 3
      %p55 = por %p53, %p54
      %p56 = scmp.ne.s32.totalorder %s45, %s46
      %p57 = scmp.eq.s32.totalorder %s23, 0
      %p58 = por %p56, %p57
      %p59 = scmp.ne.s32.totalorder %s45, %s46
      %p60 = scmp.eq.s32.totalorder %s24, 3
      %p61 = por %p59, %p60
      %p63 = scmp.ne.s32.totalorder %s46, %s62
      %p64 = scmp.eq.s32.totalorder %s24, 0
      %p65 = por %p63, %p64
      %s67 = sadd.s32 %s66, 1
      %p70 = scmp.eq.s32.totalorder %s18, 3
      %p71 = scmp.ne.s32.totalorder %s66, %s68
      %p72 = scmp.eq.s32.totalorder %s18, 0
      %p73 = por %p71, %p72
      %p74 = scmp.ne.s32.totalorder %s66, %s68
      %p75 = scmp.eq.s32.totalorder %s23, 3
      %p76 = por %p74, %p75
      %p77 = scmp.ne.s32.totalorder %s68, %s69
      %p78 = scmp.eq.s32.totalorder %s23, 0
      %p79 = por %p77, %p78
      %p80 = scmp.ne.s32.totalorder %s68, %s69
      %p81 = scmp.eq.s32.totalorder %s24, 3
      %p82 = por %p80, %p81
      %p84 = scmp.ne.s32.totalorder %s69, %s83
      %p85 = scmp.eq.s32.totalorder %s24, 0
      %p86 = por %p84, %p85
      %s88 = sadd.s32 %s87, 1
      %p91 = scmp.eq.s32.totalorder %s18, 3
      %p92 = scmp.ne.s32.totalorder %s87, %s89
      %p93 = scmp.eq.s32.totalorder %s18, 0
      %p94 = por %p92, %p93
      %p95 = scmp.ne.s32.totalorder %s87, %s89
      %p96 = scmp.eq.s32.totalorder %s23, 3
      %p97 = por %p95, %p96
      %p98 = scmp.ne.s32.totalorder %s89, %s90
      %p99 = scmp.eq.s32.totalorder %s23, 0
      %p100 = por %p98, %p99
      %p101 = scmp.ne.s32.totalorder %s89, %s90
      %p102 = scmp.eq.s32.totalorder %s24, 3
      %p103 = por %p101, %p102
      %p105 = scmp.ne.s32.totalorder %s90, %s104
      %p106 = scmp.eq.s32.totalorder %s24, 0
      %p107 = por %p105, %p106
      %s108 = ssub.s32 %s25, %s37
      %p109 = scmp.eq.s32.totalorder %s108, 0
      %s111 = sadd.s32 %s110, 1
      %s112 = scalar_select %p109, %s110, %s111
      %p115 = pneg %p109
      %p116 = scmp.eq.s32.totalorder %s18, 3
      %p117 = por %p115, %p116
      %p118 = scmp.ne.s32.totalorder %s110, %s113
      %p119 = scmp.eq.s32.totalorder %s18, 0
      %p120 = por %p118, %p119
      %p121 = scmp.ne.s32.totalorder %s110, %s113
      %p122 = scmp.eq.s32.totalorder %s23, 3
      %p123 = por %p121, %p122
      %p124 = scmp.ne.s32.totalorder %s113, %s114
      %p125 = scmp.eq.s32.totalorder %s23, 0
      %p126 = por %p124, %p125
      %p127 = scmp.ne.s32.totalorder %s113, %s114
      %p128 = scmp.eq.s32.totalorder %s24, 3
      %p129 = por %p127, %p128
      %p131 = scmp.ne.s32.totalorder %s114, %s130
      %p132 = scmp.eq.s32.totalorder %s24, 0
      %p133 = por %p131, %p132
      %s134 = ssub.s32 %s25, %s37
      %p135 = scmp.eq.s32.totalorder %s134, 0
      %s137 = sadd.s32 %s136, 1
      %s138 = scalar_select %p135, %s136, %s137
      %p141 = pneg %p135
      %p142 = scmp.eq.s32.totalorder %s18, 3
      %p143 = por %p141, %p142
      %p144 = scmp.ne.s32.totalorder %s136, %s139
      %p145 = scmp.eq.s32.totalorder %s18, 0
      %p146 = por %p144, %p145
      %p147 = scmp.ne.s32.totalorder %s136, %s139
      %p148 = scmp.eq.s32.totalorder %s23, 3
      %p149 = por %p147, %p148
      %p150 = scmp.ne.s32.totalorder %s139, %s140
      %p151 = scmp.eq.s32.totalorder %s23, 0
      %p152 = por %p150, %p151
      %p153 = scmp.ne.s32.totalorder %s139, %s140
      %p154 = scmp.eq.s32.totalorder %s24, 3
      %p155 = por %p153, %p154
      %p157 = scmp.ne.s32.totalorder %s140, %s156
      %p158 = scmp.eq.s32.totalorder %s24, 0
      %p159 = por %p157, %p158
      %s160 = ssub.s32 %s26, %s33
      %s161 = ssub.s32 %s25, %s37
      %s162 = sor.u32 %s160, %s161
      %p163 = scmp.eq.s32.totalorder %s162, 0
      %s165 = sadd.s32 %s164, 1
      %s166 = scalar_select %p163, %s164, %s165
      %p169 = pneg %p163
      %p170 = scmp.eq.s32.totalorder %s18, 3
      %p171 = por %p169, %p170
      %p172 = scmp.ne.s32.totalorder %s164, %s167
      %p173 = scmp.eq.s32.totalorder %s18, 0
      %p174 = por %p172, %p173
      %p175 = scmp.ne.s32.totalorder %s164, %s167
      %p176 = scmp.eq.s32.totalorder %s23, 3
      %p177 = por %p175, %p176
      %p178 = scmp.ne.s32.totalorder %s167, %s168
      %p179 = scmp.eq.s32.totalorder %s23, 0
      %p180 = por %p178, %p179
      %p181 = scmp.ne.s32.totalorder %s167, %s168
      %p182 = scmp.eq.s32.totalorder %s24, 3
      %p183 = por %p181, %p182
      %p185 = scmp.ne.s32.totalorder %s168, %s184
      %p186 = scmp.eq.s32.totalorder %s24, 0
      %p187 = por %p185, %p186
      %s188 = ssub.s32 %s25, %s37
      %p189 = scmp.eq.s32.totalorder %s188, 0
      %s191 = sadd.s32 %s190, 1
      %s192 = scalar_select %p189, %s190, %s191
      %p195 = pneg %p189
      %p196 = scmp.eq.s32.totalorder %s18, 3
      %p197 = por %p195, %p196
      %p198 = scmp.ne.s32.totalorder %s190, %s193
      %p199 = scmp.eq.s32.totalorder %s18, 0
      %p200 = por %p198, %p199
      %p201 = scmp.ne.s32.totalorder %s190, %s193
      %p202 = scmp.eq.s32.totalorder %s23, 3
      %p203 = por %p201, %p202
      %p204 = scmp.ne.s32.totalorder %s193, %s194
      %p205 = scmp.eq.s32.totalorder %s23, 0
      %p206 = por %p204, %p205
      %p207 = scmp.ne.s32.totalorder %s193, %s194
      %p208 = scmp.eq.s32.totalorder %s24, 3
      %p209 = por %p207, %p208
      %p211 = scmp.ne.s32.totalorder %s194, %s210
      %p212 = scmp.eq.s32.totalorder %s24, 0
      %p213 = por %p211, %p212
      %s214 = ssub.s32 %s25, %s37
      %p215 = scmp.eq.s32.totalorder %s214, 0
      %s217 = sadd.s32 %s216, 1
      %s218 = scalar_select %p215, %s216, %s217
      %p221 = pneg %p215
      %p222 = scmp.eq.s32.totalorder %s18, 3
      %p223 = por %p221, %p222
      %p224 = scmp.ne.s32.totalorder %s216, %s219
      %p225 = scmp.eq.s32.totalorder %s18, 0
      %p226 = por %p224, %p225
      %p227 = scmp.ne.s32.totalorder %s216, %s219
      %p228 = scmp.eq.s32.totalorder %s23, 3
      %p229 = por %p227, %p228
      %p230 = scmp.ne.s32.totalorder %s219, %s220
      %p231 = scmp.eq.s32.totalorder %s23, 0
      %p232 = por %p230, %p231
      %p233 = scmp.ne.s32.totalorder %s219, %s220
      %p234 = scmp.eq.s32.totalorder %s24, 3
      %p235 = por %p233, %p234
      %p237 = scmp.ne.s32.totalorder %s220, %s236
      %p238 = scmp.eq.s32.totalorder %s24, 0
      %p239 = por %p237, %p238
      %p240 = scmp.le.s32.totalorder 1, %s18
      %p241 = scmp.lt.s32.totalorder %s18, 5
      %p242 = pnand %p240, %p241
      %p243 = pneg %p242
      // Predicated region
      $region9: #{lstm_forward.1} parent=5 // pred_check
        _
      $region10: #{lstm_forward.1} parent=5 // pred_check_branch
        %245 = sbr.rel (%p242) target = $region12
      $region11: #{lstm_forward.1} parent=5 // pred_region
        %s246 = ssub.s32 %s18, 1
        // Predicated region
        $region13: #{lstm_forward.1} parent=11 // pred_check
          %p247 = pneg %p79
        $region14: #{lstm_forward.1} parent=11 // pred_check_branch
          %249 = sbr.rel (%p247) target = $region16
        $region15: #{lstm_forward.1} parent=11 // pred_region
          _
        $region16: #{lstm_forward.1} parent=11 // pred_fallthru
          _
        // Predicated region
        $region17: #{lstm_forward.1} parent=11 // pred_check
          %p250 = pneg %p100
        $region18: #{lstm_forward.1} parent=11 // pred_check_branch
          %252 = sbr.rel (%p250) target = $region20
        $region19: #{lstm_forward.1} parent=11 // pred_region
          _
        $region20: #{lstm_forward.1} parent=11 // pred_fallthru
          _
        // Predicated region
        $region21: #{lstm_forward.1} parent=11 // pred_check
          %p253 = pneg %p126
        $region22: #{lstm_forward.1} parent=11 // pred_check_branch
          %255 = sbr.rel (%p253) target = $region24
        $region23: #{lstm_forward.1} parent=11 // pred_region
          %p256 = scmp.lt.s32.totalorder %s27, 0
          %s257 = scalar_select %p256, %s27, 0
          %s258 = smul.addr %s257, 8
          %s259 = scalar_lea.vmem %s3, %s258
        $region24: #{lstm_forward.1} parent=11 // pred_fallthru
          _
        // Predicated region
        $region25: #{lstm_forward.1} parent=11 // pred_check
          %p260 = pneg %p152
        $region26: #{lstm_forward.1} parent=11 // pred_check_branch
          %262 = sbr.rel (%p260) target = $region28
        $region27: #{lstm_forward.1} parent=11 // pred_region
          %p263 = scmp.lt.s32.totalorder %s27, 0
          %s264 = scalar_select %p263, %s27, 0
          %s265 = smul.addr %s264, 8
          %s266 = scalar_lea.vmem %s4, %s265
        $region28: #{lstm_forward.1} parent=11 // pred_fallthru
          _
      $region12: #{lstm_forward.1} parent=5 // pred_fallthru
        _
      %p267 = scmp.lt.s32.totalorder %s18, 4
      // Predicated region
      $region29: #{lstm_forward.1} parent=5 // pred_check
        %p268 = pneg %p267
      $region30: #{lstm_forward.1} parent=5 // pred_check_branch
        %270 = sbr.rel (%p268) target = $region32
      $region31: #{lstm_forward.1} parent=5 // pred_region
        // Predicated region
        $region33: #{lstm_forward.1} parent=31 // pred_check
          %p271 = pneg %p52
        $region34: #{lstm_forward.1} parent=31 // pred_check_branch
          %273 = sbr.rel (%p271) target = $region36
        $region35: #{lstm_forward.1} parent=31 // pred_region
          %s274 = smul.u32 8, %s26
          %p275 = scmp.lt.s32.totalorder %s274, 31
          %s276 = scalar_select %p275, %s274, 31
          %p277 = scmp.lt.s32.totalorder %s25, 0
          %s278 = scalar_select %p277, %s25, 0
          %s279 = smul.addr %s278, 4
          %s280 = smul.addr %s276, 4
          %s281 = sadd.s32 %s279, %s280
          %s282 = smul.addr %s281, 4
          %s283 = scalar_lea.vmem %s0, %s282
          %s284 = smul.u32 8, %s26
        $region36: #{lstm_forward.1} parent=31 // pred_fallthru
          _
      $region32: #{lstm_forward.1} parent=5 // pred_fallthru
        _
      %p285 = scmp.le.s32.totalorder 1, %s18
      %p286 = scmp.lt.s32.totalorder %s18, 5
      %p287 = pnand %p285, %p286
      %p288 = pneg %p287
      // Predicated region
      $region37: #{lstm_forward.1} parent=5 // pred_check
        _
      $region38: #{lstm_forward.1} parent=5 // pred_check_branch
        %290 = sbr.rel (%p287) target = $region40
      $region39: #{lstm_forward.1} parent=5 // pred_region
        %s291 = ssub.s32 %s18, 1
        %s292 = smul.u32 8, %s28
        %p293 = scmp.lt.s32.totalorder %s292, 31
        %s294 = scalar_select %p293, %s292, 31
        %p295 = scmp.lt.s32.totalorder %s27, 0
        %s296 = scalar_select %p295, %s27, 0
        %s297 = smul.addr %s296, 4
        %s298 = smul.addr %s294, 4
        %s299 = sadd.s32 %s297, %s298
        %s300 = smul.addr %s299, 4
        %s301 = scalar_lea.vmem %s0, %s300
        %p302 = pneg %p58
        %p303 = pneg %p55
        %p304 = pneg %p79
        %p305 = pneg %p76
        %p306 = pneg %p100
        %p307 = pneg %p97
        %p308 = scmp.lt.s32.totalorder %s27, 0
        %s309 = scalar_select %p308, %s27, 0
        %s310 = smul.addr %s309, 8
        %s311 = scalar_lea.vmem %s3, %s310
        %p312 = pneg %p126
        %p313 = pneg %p123
        %p314 = scmp.lt.s32.totalorder %s27, 0
        %s315 = scalar_select %p314, %s27, 0
        %s316 = smul.addr %s315, 8
        %s317 = scalar_lea.vmem %s4, %s316
        %p318 = pneg %p152
        %p319 = pneg %p149
        %p320 = pneg %p180
        %p321 = pneg %p177
        %s322 = sand.u32 %s167, 1
        %s323 = scalar_lea.sflag [#allocation5], %s322
        %s324 = sand.u32 %s167, 1
        %s325 = smul.addr %s324, 64
        %s326 = scalar_lea.vmem [#allocation4], %s325
        %p327 = pneg %p206
        %p328 = pneg %p203
        %p329 = pneg %p232
        %p330 = pneg %p229
        %s331 = smul.u32 8, %s28
        %p332 = scmp.lt.s32.totalorder %s331, 31
        %s333 = scalar_select %p332, %s331, 31
        %p334 = scmp.lt.s32.totalorder %s27, 0
        %s335 = scalar_select %p334, %s27, 0
        %s336 = smul.addr %s335, 4
        %s337 = smul.addr %s333, 4
        %s338 = sadd.s32 %s336, %s337
        %s339 = smul.addr %s338, 4
        %s340 = scalar_lea.vmem %s0, %s339
        %s341 = smul.u32 8, %s28
        %p342 = scmp.lt.s32.totalorder %s27, 0
        %s343 = scalar_select %p342, %s27, 0
        %s344 = smul.addr %s343, 8
        %s345 = scalar_lea.vmem %s3, %s344
        %p346 = scmp.lt.s32.totalorder %s27, 0
        %s347 = scalar_select %p346, %s27, 0
        %s348 = smul.addr %s347, 8
        %s349 = scalar_lea.vmem %s4, %s348
        %s350 = smul.u32 8, %s28
        %p352 = scmp.eq.s32.totalorder %s28, 0
        // Predicated region
        $region41: #{lstm_forward.1} parent=39 // pred_check
          %p353 = pneg %p352
        $region42: #{lstm_forward.1} parent=39 // pred_check_branch
          %355 = sbr.rel (%p353) target = $region44
        $region43: #{lstm_forward.1} parent=39 // pred_region
          %v356 = vld [vmem:[%s345] sm:$0xff]
          %357 = vst [vmem:[#allocation2] sm:$0xff] %v356
          %v358 = vld [vmem:[%s349] sm:$0xff]
          %359 = vst [vmem:[#allocation3] sm:$0xff] %v358
        $region44: #{lstm_forward.1} parent=39 // pred_fallthru
          _
        %v360 = vld [vmem:[%s2] sm:$0xff]
        %v361 = vld [vmem:[%s2 + $0x8] sm:$0xff]
        %v362 = vld [vmem:[%s2 + $0x10] sm:$0xff]
        %v363 = vld [vmem:[%s2 + $0x18] sm:$0xff]
        %v364 = vld [vmem:[%s2 + $0x20] sm:$0xff]
        %v365 = vld [vmem:[%s2 + $0x28] sm:$0xff]
        %v366 = vld [vmem:[%s2 + $0x30] sm:$0xff]
        %v367 = vld [vmem:[%s2 + $0x38] sm:$0xff]
        %v368 = vld [vmem:[%s2 + $0x40] sm:$0xff]
        %v369 = vld [vmem:[%s2 + $0x48] sm:$0xff]
        %v370 = vld [vmem:[%s2 + $0x50] sm:$0xff]
        %v371 = vld [vmem:[%s2 + $0x58] sm:$0xff]
        %v372 = vld [vmem:[%s2 + $0x60] sm:$0xff]
        %v373 = vld [vmem:[%s2 + $0x68] sm:$0xff]
        %v374 = vld [vmem:[%s2 + $0x70] sm:$0xff]
        %v375 = vld [vmem:[%s2 + $0x78] sm:$0xff]
        %v376 = vld [vmem:[%s2 + $0x80] sm:$0xff]
        %v377 = vld [vmem:[%s2 + $0x88] sm:$0xff]
        %v378 = vld [vmem:[%s2 + $0x90] sm:$0xff]
        %v379 = vld [vmem:[%s2 + $0x98] sm:$0xff]
        %v380 = vld [vmem:[%s2 + $0xa0] sm:$0xff]
        %v381 = vld [vmem:[%s2 + $0xa8] sm:$0xff]
        %v382 = vld [vmem:[%s2 + $0xb0] sm:$0xff]
        %v383 = vld [vmem:[%s2 + $0xb8] sm:$0xff]
        %v384 = vld [vmem:[%s2 + $0xc0] sm:$0xff]
        %v385 = vld [vmem:[%s2 + $0xc8] sm:$0xff]
        %v386 = vld [vmem:[%s2 + $0xd0] sm:$0xff]
        %v387 = vld [vmem:[%s2 + $0xd8] sm:$0xff]
        %v388 = vld [vmem:[%s2 + $0xe0] sm:$0xff]
        %v389 = vld [vmem:[%s2 + $0xe8] sm:$0xff]
        %v390 = vld [vmem:[%s2 + $0xf0] sm:$0xff]
        %v391 = vld [vmem:[%s2 + $0xf8] sm:$0xff]
        %v392 = vld [vmem:[%s1] sm:$0xf]
        %v394 = vlaneseq
        %v395 = vshrl.u32 %v394, 7
        %v396 = vsub.s32 0, %v395
        %v397 = vrot.slane %v392, %v396
        %v398 = vlaneseq
        %v399 = vshrl.u32 %v398, 7
        %v400 = vsub.s32 1, %v399
        %v401 = vrot.slane %v392, %v400
        %v402 = vlaneseq
        %v403 = vshrl.u32 %v402, 7
        %v404 = vsub.s32 2, %v403
        %v405 = vrot.slane %v392, %v404
        %v406 = vlaneseq
        %v407 = vshrl.u32 %v406, 7
        %v408 = vsub.s32 3, %v407
        %v409 = vrot.slane %v392, %v408
        %v414 = vld [vmem:[#allocation2] sm:$0xff]
        %v415 = vld [vmem:[#allocation3] sm:$0xff]
        %v416 = vld [vmem:[%s340] sm:$0xff]
        %v417 = vld [vmem:[%s340 + $0x8] sm:$0xff]
        %v418 = vunpack.c.l.bf16 %v416
        %v419 = vunpack.c.h.bf16 %v416
        %v420 = vunpack.c.l.bf16 %v417
        %v421 = vunpack.c.h.bf16 %v417
        %v422 = vadd.f32 %v418, %v397
        %v423 = vadd.f32 %v419, %v401
        %v424 = vadd.f32 %v420, %v405
        %v425 = vadd.f32 %v421, %v409
        %v426 = vpack.c.bf16 %v414, %v414
        %v459 = vunpack.c.l.b16 %v360
        %v460 = vunpack.c.h.b16 %v360
        %v461 = vunpack.c.l.b16 %v361
        %v462 = vunpack.c.h.b16 %v361
        %v463 = vunpack.c.l.b16 %v362
        %v464 = vunpack.c.h.b16 %v362
        %v465 = vunpack.c.l.b16 %v363
        %v466 = vunpack.c.h.b16 %v363
        %v467 = vunpack.c.l.b16 %v364
        %v468 = vunpack.c.h.b16 %v364
        %v469 = vunpack.c.l.b16 %v365
        %v470 = vunpack.c.h.b16 %v365
        %v471 = vunpack.c.l.b16 %v366
        %v472 = vunpack.c.h.b16 %v366
        %v473 = vunpack.c.l.b16 %v367
        %v474 = vunpack.c.h.b16 %v367
        %v475 = vunpack.c.l.b16 %v368
        %v476 = vunpack.c.h.b16 %v368
        %v477 = vunpack.c.l.b16 %v369
        %v478 = vunpack.c.h.b16 %v369
        %v479 = vunpack.c.l.b16 %v370
        %v480 = vunpack.c.h.b16 %v370
        %v481 = vunpack.c.l.b16 %v371
        %v482 = vunpack.c.h.b16 %v371
        %v483 = vunpack.c.l.b16 %v372
        %v484 = vunpack.c.h.b16 %v372
        %v485 = vunpack.c.l.b16 %v373
        %v486 = vunpack.c.h.b16 %v373
        %v487 = vunpack.c.l.b16 %v374
        %v488 = vunpack.c.h.b16 %v374
        %v489 = vunpack.c.l.b16 %v375
        %v490 = vunpack.c.h.b16 %v375
        %v491 = vunpack.c.l.b16 %v376
        %v492 = vunpack.c.h.b16 %v376
        %v493 = vunpack.c.l.b16 %v377
        %v494 = vunpack.c.h.b16 %v377
        %v495 = vunpack.c.l.b16 %v378
        %v496 = vunpack.c.h.b16 %v378
        %v497 = vunpack.c.l.b16 %v379
        %v498 = vunpack.c.h.b16 %v379
        %v499 = vunpack.c.l.b16 %v380
        %v500 = vunpack.c.h.b16 %v380
        %v501 = vunpack.c.l.b16 %v381
        %v502 = vunpack.c.h.b16 %v381
        %v503 = vunpack.c.l.b16 %v382
        %v504 = vunpack.c.h.b16 %v382
        %v505 = vunpack.c.l.b16 %v383
        %v506 = vunpack.c.h.b16 %v383
        %v507 = vunpack.c.l.b16 %v384
        %v508 = vunpack.c.h.b16 %v384
        %v509 = vunpack.c.l.b16 %v385
        %v510 = vunpack.c.h.b16 %v385
        %v511 = vunpack.c.l.b16 %v386
        %v512 = vunpack.c.h.b16 %v386
        %v513 = vunpack.c.l.b16 %v387
        %v514 = vunpack.c.h.b16 %v387
        %v515 = vunpack.c.l.b16 %v388
        %v516 = vunpack.c.h.b16 %v388
        %v517 = vunpack.c.l.b16 %v389
        %v518 = vunpack.c.h.b16 %v389
        %v519 = vunpack.c.l.b16 %v390
        %v520 = vunpack.c.h.b16 %v390
        %v521 = vunpack.c.l.b16 %v391
        %v522 = vunpack.c.h.b16 %v391
        %v523 = vpack.c.b16 %v463, %v459
        %v524 = vpack.c.b16 %v464, %v460
        %v525 = vpack.c.b16 %v465, %v461
        %v526 = vpack.c.b16 %v466, %v462
        %v527 = vpack.c.b16 %v471, %v467
        %v528 = vpack.c.b16 %v472, %v468
        %v529 = vpack.c.b16 %v473, %v469
        %v530 = vpack.c.b16 %v474, %v470
        %v531 = vpack.c.b16 %v479, %v475
        %v532 = vpack.c.b16 %v480, %v476
        %v533 = vpack.c.b16 %v481, %v477
        %v534 = vpack.c.b16 %v482, %v478
        %v535 = vpack.c.b16 %v487, %v483
        %v536 = vpack.c.b16 %v488, %v484
        %v537 = vpack.c.b16 %v489, %v485
        %v538 = vpack.c.b16 %v490, %v486
        %v539 = vpack.c.b16 %v495, %v491
        %v540 = vpack.c.b16 %v496, %v492
        %v541 = vpack.c.b16 %v497, %v493
        %v542 = vpack.c.b16 %v498, %v494
        %v543 = vpack.c.b16 %v503, %v499
        %v544 = vpack.c.b16 %v504, %v500
        %v545 = vpack.c.b16 %v505, %v501
        %v546 = vpack.c.b16 %v506, %v502
        %v547 = vpack.c.b16 %v511, %v507
        %v548 = vpack.c.b16 %v512, %v508
        %v549 = vpack.c.b16 %v513, %v509
        %v550 = vpack.c.b16 %v514, %v510
        %v551 = vpack.c.b16 %v519, %v515
        %v552 = vpack.c.b16 %v520, %v516
        %v553 = vpack.c.b16 %v521, %v517
        %v554 = vpack.c.b16 %v522, %v518
        %587 = vmatprep.subr.bf16.mxu0 %v524
        %588 = vmatpush1.bf16.msra.mxu0 %v523
        %589 = vmatprep.subr.bf16.mxu0 %v528
        %590 = vmatpush1.bf16.msra.mxu0 %v527
        %591 = vmatprep.subr.bf16.mxu0 %v532
        %592 = vmatpush1.bf16.msra.mxu0 %v531
        %593 = vmatprep.subr.bf16.mxu0 %v536
        %594 = vmatpush1.bf16.msra.mxu0 %v535
        %595 = vmatprep.subr.bf16.mxu0 %v540
        %596 = vmatpush1.bf16.msra.mxu0 %v539
        %597 = vmatprep.subr.bf16.mxu0 %v544
        %598 = vmatpush1.bf16.msra.mxu0 %v543
        %599 = vmatprep.subr.bf16.mxu0 %v548
        %600 = vmatpush1.bf16.msra.mxu0 %v547
        %601 = vmatprep.subr.bf16.mxu0 %v552
        %602 = vmatpush1.bf16.msra.mxu0 %v551
        %603 = vmatprep.subr.bf16.mxu0 0
        %604 = vmatpush1.bf16.msra.mxu0 0
        %605 = vmatprep.subr.bf16.mxu0 0
        %606 = vmatpush1.bf16.msra.mxu0 0
        %607 = vmatprep.subr.bf16.mxu0 0
        %608 = vmatpush1.bf16.msra.mxu0 0
        %609 = vmatprep.subr.bf16.mxu0 0
        %610 = vmatpush1.bf16.msra.mxu0 0
        %611 = vmatprep.subr.bf16.mxu0 0
        %612 = vmatpush1.bf16.msra.mxu0 0
        %613 = vmatprep.subr.bf16.mxu0 0
        %614 = vmatpush1.bf16.msra.mxu0 0
        %615 = vmatprep.subr.bf16.mxu0 0
        %616 = vmatpush1.bf16.msra.mxu0 0
        %617 = vmatprep.subr.bf16.mxu0 0
        %618 = vmatpush1.bf16.msra.mxu0 0
        %619 = vmatprep.mubr.bf16.mxu0 0
        %620 = vmatmul.mubr.bf16.gmra.mrb[0].mxu0 %v426
        %v621 = vpop.f32.mrb[0].mxu0
        %v622 = vadd.f32 0.0, %v621
        %v623 = vpop.f32.mrb[0].mxu0
        %v624 = vadd.f32 0.0, %v623
        %v625 = vpop.f32.mrb[0].mxu0
        %v626 = vpop.f32.mrb[0].mxu0
        %627 = vdwg.mxu0
        %628 = vmatprep.subr.bf16.mxu0 %v526
        %629 = vmatpush1.bf16.msra.mxu0 %v525
        %630 = vmatprep.subr.bf16.mxu0 %v530
        %631 = vmatpush1.bf16.msra.mxu0 %v529
        %632 = vmatprep.subr.bf16.mxu0 %v534
        %633 = vmatpush1.bf16.msra.mxu0 %v533
        %634 = vmatprep.subr.bf16.mxu0 %v538
        %635 = vmatpush1.bf16.msra.mxu0 %v537
        %636 = vmatprep.subr.bf16.mxu0 %v542
        %637 = vmatpush1.bf16.msra.mxu0 %v541
        %638 = vmatprep.subr.bf16.mxu0 %v546
        %639 = vmatpush1.bf16.msra.mxu0 %v545
        %640 = vmatprep.subr.bf16.mxu0 %v550
        %641 = vmatpush1.bf16.msra.mxu0 %v549
        %642 = vmatprep.subr.bf16.mxu0 %v554
        %643 = vmatpush1.bf16.msra.mxu0 %v553
        %644 = vmatprep.subr.bf16.mxu0 0
        %645 = vmatpush1.bf16.msra.mxu0 0
        %646 = vmatprep.subr.bf16.mxu0 0
        %647 = vmatpush1.bf16.msra.mxu0 0
        %648 = vmatprep.subr.bf16.mxu0 0
        %649 = vmatpush1.bf16.msra.mxu0 0
        %650 = vmatprep.subr.bf16.mxu0 0
        %651 = vmatpush1.bf16.msra.mxu0 0
        %652 = vmatprep.subr.bf16.mxu0 0
        %653 = vmatpush1.bf16.msra.mxu0 0
        %654 = vmatprep.subr.bf16.mxu0 0
        %655 = vmatpush1.bf16.msra.mxu0 0
        %656 = vmatprep.subr.bf16.mxu0 0
        %657 = vmatpush1.bf16.msra.mxu0 0
        %658 = vmatprep.subr.bf16.mxu0 0
        %659 = vmatpush1.bf16.msra.mxu0 0
        %660 = vmatprep.mubr.bf16.mxu0 0
        %661 = vmatmul.mubr.bf16.gmra.mrb[0].mxu0 %v426
        %v662 = vpop.f32.mrb[0].mxu0
        %v663 = vadd.f32 0.0, %v662
        %v664 = vpop.f32.mrb[0].mxu0
        %v665 = vadd.f32 0.0, %v664
        %v666 = vpop.f32.mrb[0].mxu0
        %v667 = vpop.f32.mrb[0].mxu0
        %668 = vdwg.mxu0
        %v669 = vadd.f32 %v422, %v622
        %v670 = vadd.f32 %v423, %v624
        %v671 = vadd.f32 %v424, %v663
        %v672 = vadd.f32 %v425, %v665
        %v673 = vsub.f32 0.0, %v669
        %v674 = vsub.f32 0.0, %v670
        %v675 = vsub.f32 0.0, %v671
        %v676 = vmul.f32 %v673, 1.442695
        %v677 = vpow.pop %v676
        %v678 = vmul.f32 %v674, 1.442695
        %v679 = vpow.pop %v678
        %v680 = vmul.f32 %v675, 1.442695
        %v681 = vpow.pop %v680
        %v682 = vadd.f32 %v677, 1.0
        %v683 = vadd.f32 %v679, 1.0
        %v684 = vadd.f32 %v681, 1.0
        %v685 = vrcp.pop %v682
        %v686 = vrcp.pop %v683
        %v687 = vrcp.pop %v684
        %v688 = vtanh.pop %v672
        %v689 = vmul.f32 %v686, %v415
        %v690 = vmul.f32 %v685, %v688
        %v691 = vadd.f32 %v689, %v690
        %v692 = vtanh.pop %v691
        %v693 = vmul.f32 %v687, %v692
        %694 = vst [vmem:[%s326] sm:$0xff] %v693
        %s695 = scalar_lea.vmem %s340, 16
        %v696 = vld [vmem:[%s695] sm:$0xff]
        %v697 = vld [vmem:[%s695 + $0x8] sm:$0xff]
        %v698 = vunpack.c.l.bf16 %v696
        %v699 = vunpack.c.h.bf16 %v696
        %v700 = vunpack.c.l.bf16 %v697
        %v701 = vunpack.c.h.bf16 %v697
        %v702 = vadd.f32 %v698, %v397
        %v703 = vadd.f32 %v699, %v401
        %v704 = vadd.f32 %v700, %v405
        %v705 = vadd.f32 %v701, %v409
        %v706 = vpack.c.bf16 %v693, %v693
        %707 = vmatprep.subr.bf16.mxu0 %v524
        %708 = vmatpush1.bf16.msra.mxu0 %v523
        %709 = vmatprep.subr.bf16.mxu0 %v528
        %710 = vmatpush1.bf16.msra.mxu0 %v527
        %711 = vmatprep.subr.bf16.mxu0 %v532
        %712 = vmatpush1.bf16.msra.mxu0 %v531
        %713 = vmatprep.subr.bf16.mxu0 %v536
        %714 = vmatpush1.bf16.msra.mxu0 %v535
        %715 = vmatprep.subr.bf16.mxu0 %v540
        %716 = vmatpush1.bf16.msra.mxu0 %v539
        %717 = vmatprep.subr.bf16.mxu0 %v544
        %718 = vmatpush1.bf16.msra.mxu0 %v543
        %719 = vmatprep.subr.bf16.mxu0 %v548
        %720 = vmatpush1.bf16.msra.mxu0 %v547
        %721 = vmatprep.subr.bf16.mxu0 %v552
        %722 = vmatpush1.bf16.msra.mxu0 %v551
        %723 = vmatprep.subr.bf16.mxu0 0
        %724 = vmatpush1.bf16.msra.mxu0 0
        %725 = vmatprep.subr.bf16.mxu0 0
        %726 = vmatpush1.bf16.msra.mxu0 0
        %727 = vmatprep.subr.bf16.mxu0 0
        %728 = vmatpush1.bf16.msra.mxu0 0
        %729 = vmatprep.subr.bf16.mxu0 0
        %730 = vmatpush1.bf16.msra.mxu0 0
        %731 = vmatprep.subr.bf16.mxu0 0
        %732 = vmatpush1.bf16.msra.mxu0 0
        %733 = vmatprep.subr.bf16.mxu0 0
        %734 = vmatpush1.bf16.msra.mxu0 0
        %735 = vmatprep.subr.bf16.mxu0 0
        %736 = vmatpush1.bf16.msra.mxu0 0
        %737 = vmatprep.subr.bf16.mxu0 0
        %738 = vmatpush1.bf16.msra.mxu0 0
        %739 = vmatprep.mubr.bf16.mxu0 0
        %740 = vmatmul.mubr.bf16.gmra.mrb[0].mxu0 %v706
        %v741 = vpop.f32.mrb[0].mxu0
        %v742 = vadd.f32 0.0, %v741
        %v743 = vpop.f32.mrb[0].mxu0
        %v744 = vadd.f32 0.0, %v743
        %v745 = vpop.f32.mrb[0].mxu0
        %v746 = vpop.f32.mrb[0].mxu0
        %747 = vdwg.mxu0
        %748 = vmatprep.subr.bf16.mxu0 %v526
        %749 = vmatpush1.bf16.msra.mxu0 %v525
        %750 = vmatprep.subr.bf16.mxu0 %v530
        %751 = vmatpush1.bf16.msra.mxu0 %v529
        %752 = vmatprep.subr.bf16.mxu0 %v534
        %753 = vmatpush1.bf16.msra.mxu0 %v533
        %754 = vmatprep.subr.bf16.mxu0 %v538
        %755 = vmatpush1.bf16.msra.mxu0 %v537
        %756 = vmatprep.subr.bf16.mxu0 %v542
        %757 = vmatpush1.bf16.msra.mxu0 %v541
        %758 = vmatprep.subr.bf16.mxu0 %v546
        %759 = vmatpush1.bf16.msra.mxu0 %v545
        %760 = vmatprep.subr.bf16.mxu0 %v550
        %761 = vmatpush1.bf16.msra.mxu0 %v549
        %762 = vmatprep.subr.bf16.mxu0 %v554
        %763 = vmatpush1.bf16.msra.mxu0 %v553
        %764 = vmatprep.subr.bf16.mxu0 0
        %765 = vmatpush1.bf16.msra.mxu0 0
        %766 = vmatprep.subr.bf16.mxu0 0
        %767 = vmatpush1.bf16.msra.mxu0 0
        %768 = vmatprep.subr.bf16.mxu0 0
        %769 = vmatpush1.bf16.msra.mxu0 0
        %770 = vmatprep.subr.bf16.mxu0 0
        %771 = vmatpush1.bf16.msra.mxu0 0
        %772 = vmatprep.subr.bf16.mxu0 0
        %773 = vmatpush1.bf16.msra.mxu0 0
        %774 = vmatprep.subr.bf16.mxu0 0
        %775 = vmatpush1.bf16.msra.mxu0 0
        %776 = vmatprep.subr.bf16.mxu0 0
        %777 = vmatpush1.bf16.msra.mxu0 0
        %778 = vmatprep.subr.bf16.mxu0 0
        %779 = vmatpush1.bf16.msra.mxu0 0
        %780 = vmatprep.mubr.bf16.mxu0 0
        %781 = vmatmul.mubr.bf16.gmra.mrb[0].mxu0 %v706
        %v782 = vpop.f32.mrb[0].mxu0
        %v783 = vadd.f32 0.0, %v782
        %v784 = vpop.f32.mrb[0].mxu0
        %v785 = vadd.f32 0.0, %v784
        %v786 = vpop.f32.mrb[0].mxu0
        %v787 = vpop.f32.mrb[0].mxu0
        %788 = vdwg.mxu0
        %v789 = vadd.f32 %v702, %v742
        %v790 = vadd.f32 %v703, %v744
        %v791 = vadd.f32 %v704, %v783
        %v792 = vadd.f32 %v705, %v785
        %v793 = vsub.f32 0.0, %v789
        %v794 = vsub.f32 0.0, %v790
        %v795 = vsub.f32 0.0, %v791
        %v796 = vmul.f32 %v793, 1.442695
        %v797 = vpow.pop %v796
        %v798 = vmul.f32 %v794, 1.442695
        %v799 = vpow.pop %v798
        %v800 = vmul.f32 %v795, 1.442695
        %v801 = vpow.pop %v800
        %v802 = vadd.f32 %v797, 1.0
        %v803 = vadd.f32 %v799, 1.0
        %v804 = vadd.f32 %v801, 1.0
        %v805 = vrcp.pop %v802
        %v806 = vrcp.pop %v803
        %v807 = vrcp.pop %v804
        %v808 = vtanh.pop %v792
        %v809 = vmul.f32 %v806, %v691
        %v810 = vmul.f32 %v805, %v808
        %v811 = vadd.f32 %v809, %v810
        %v812 = vtanh.pop %v811
        %v813 = vmul.f32 %v807, %v812
        %s814 = scalar_lea.vmem %s326, 8 [#allocation4]
        %815 = vst [vmem:[%s814] sm:$0xff] %v813
        %s816 = scalar_lea.vmem %s340, 32
        %v817 = vld [vmem:[%s816] sm:$0xff]
        %v818 = vld [vmem:[%s816 + $0x8] sm:$0xff]
        %v819 = vunpack.c.l.bf16 %v817
        %v820 = vunpack.c.h.bf16 %v817
        %v821 = vunpack.c.l.bf16 %v818
        %v822 = vunpack.c.h.bf16 %v818
        %v823 = vadd.f32 %v819, %v397
        %v824 = vadd.f32 %v820, %v401
        %v825 = vadd.f32 %v821, %v405
        %v826 = vadd.f32 %v822, %v409
        %v827 = vpack.c.bf16 %v813, %v813
        %828 = vmatprep.subr.bf16.mxu0 %v524
        %829 = vmatpush1.bf16.msra.mxu0 %v523
        %830 = vmatprep.subr.bf16.mxu0 %v528
        %831 = vmatpush1.bf16.msra.mxu0 %v527
        %832 = vmatprep.subr.bf16.mxu0 %v532
        %833 = vmatpush1.bf16.msra.mxu0 %v531
        %834 = vmatprep.subr.bf16.mxu0 %v536
        %835 = vmatpush1.bf16.msra.mxu0 %v535
        %836 = vmatprep.subr.bf16.mxu0 %v540
        %837 = vmatpush1.bf16.msra.mxu0 %v539
        %838 = vmatprep.subr.bf16.mxu0 %v544
        %839 = vmatpush1.bf16.msra.mxu0 %v543
        %840 = vmatprep.subr.bf16.mxu0 %v548
        %841 = vmatpush1.bf16.msra.mxu0 %v547
        %842 = vmatprep.subr.bf16.mxu0 %v552
        %843 = vmatpush1.bf16.msra.mxu0 %v551
        %844 = vmatprep.subr.bf16.mxu0 0
        %845 = vmatpush1.bf16.msra.mxu0 0
        %846 = vmatprep.subr.bf16.mxu0 0
        %847 = vmatpush1.bf16.msra.mxu0 0
        %848 = vmatprep.subr.bf16.mxu0 0
        %849 = vmatpush1.bf16.msra.mxu0 0
        %850 = vmatprep.subr.bf16.mxu0 0
        %851 = vmatpush1.bf16.msra.mxu0 0
        %852 = vmatprep.subr.bf16.mxu0 0
        %853 = vmatpush1.bf16.msra.mxu0 0
        %854 = vmatprep.subr.bf16.mxu0 0
        %855 = vmatpush1.bf16.msra.mxu0 0
        %856 = vmatprep.subr.bf16.mxu0 0
        %857 = vmatpush1.bf16.msra.mxu0 0
        %858 = vmatprep.subr.bf16.mxu0 0
        %859 = vmatpush1.bf16.msra.mxu0 0
        %860 = vmatprep.mubr.bf16.mxu0 0
        %861 = vmatmul.mubr.bf16.gmra.mrb[0].mxu0 %v827
        %v862 = vpop.f32.mrb[0].mxu0
        %v863 = vadd.f32 0.0, %v862
        %v864 = vpop.f32.mrb[0].mxu0
        %v865 = vadd.f32 0.0, %v864
        %v866 = vpop.f32.mrb[0].mxu0
        %v867 = vpop.f32.mrb[0].mxu0
        %868 = vdwg.mxu0
        %869 = vmatprep.subr.bf16.mxu0 %v526
        %870 = vmatpush1.bf16.msra.mxu0 %v525
        %871 = vmatprep.subr.bf16.mxu0 %v530
        %872 = vmatpush1.bf16.msra.mxu0 %v529
        %873 = vmatprep.subr.bf16.mxu0 %v534
        %874 = vmatpush1.bf16.msra.mxu0 %v533
        %875 = vmatprep.subr.bf16.mxu0 %v538
        %876 = vmatpush1.bf16.msra.mxu0 %v537
        %877 = vmatprep.subr.bf16.mxu0 %v542
        %878 = vmatpush1.bf16.msra.mxu0 %v541
        %879 = vmatprep.subr.bf16.mxu0 %v546
        %880 = vmatpush1.bf16.msra.mxu0 %v545
        %881 = vmatprep.subr.bf16.mxu0 %v550
        %882 = vmatpush1.bf16.msra.mxu0 %v549
        %883 = vmatprep.subr.bf16.mxu0 %v554
        %884 = vmatpush1.bf16.msra.mxu0 %v553
        %885 = vmatprep.subr.bf16.mxu0 0
        %886 = vmatpush1.bf16.msra.mxu0 0
        %887 = vmatprep.subr.bf16.mxu0 0
        %888 = vmatpush1.bf16.msra.mxu0 0
        %889 = vmatprep.subr.bf16.mxu0 0
        %890 = vmatpush1.bf16.msra.mxu0 0
        %891 = vmatprep.subr.bf16.mxu0 0
        %892 = vmatpush1.bf16.msra.mxu0 0
        %893 = vmatprep.subr.bf16.mxu0 0
        %894 = vmatpush1.bf16.msra.mxu0 0
        %895 = vmatprep.subr.bf16.mxu0 0
        %896 = vmatpush1.bf16.msra.mxu0 0
        %897 = vmatprep.subr.bf16.mxu0 0
        %898 = vmatpush1.bf16.msra.mxu0 0
        %899 = vmatprep.subr.bf16.mxu0 0
        %900 = vmatpush1.bf16.msra.mxu0 0
        %901 = vmatprep.mubr.bf16.mxu0 0
        %902 = vmatmul.mubr.bf16.gmra.mrb[0].mxu0 %v827
        %v903 = vpop.f32.mrb[0].mxu0
        %v904 = vadd.f32 0.0, %v903
        %v905 = vpop.f32.mrb[0].mxu0
        %v906 = vadd.f32 0.0, %v905
        %v907 = vpop.f32.mrb[0].mxu0
        %v908 = vpop.f32.mrb[0].mxu0
        %909 = vdwg.mxu0
        %v910 = vadd.f32 %v823, %v863
        %v911 = vadd.f32 %v824, %v865
        %v912 = vadd.f32 %v825, %v904
        %v913 = vadd.f32 %v826, %v906
        %v914 = vsub.f32 0.0, %v910
        %v915 = vsub.f32 0.0, %v911
        %v916 = vsub.f32 0.0, %v912
        %v917 = vmul.f32 %v914, 1.442695
        %v918 = vpow.pop %v917
        %v919 = vmul.f32 %v915, 1.442695
        %v920 = vpow.pop %v919
        %v921 = vmul.f32 %v916, 1.442695
        %v922 = vpow.pop %v921
        %v923 = vadd.f32 %v918, 1.0
        %v924 = vadd.f32 %v920, 1.0
        %v925 = vadd.f32 %v922, 1.0
        %v926 = vrcp.pop %v923
        %v927 = vrcp.pop %v924
        %v928 = vrcp.pop %v925
        %v929 = vtanh.pop %v913
        %v930 = vmul.f32 %v927, %v811
        %v931 = vmul.f32 %v926, %v929
        %v932 = vadd.f32 %v930, %v931
        %v933 = vtanh.pop %v932
        %v934 = vmul.f32 %v928, %v933
        %s935 = scalar_lea.vmem %s326, 16 [#allocation4]
        %936 = vst [vmem:[%s935] sm:$0xff] %v934
        %s937 = scalar_lea.vmem %s340, 48
        %v938 = vld [vmem:[%s937] sm:$0xff]
        %v939 = vld [vmem:[%s937 + $0x8] sm:$0xff]
        %v940 = vunpack.c.l.bf16 %v938
        %v941 = vunpack.c.h.bf16 %v938
        %v942 = vunpack.c.l.bf16 %v939
        %v943 = vunpack.c.h.bf16 %v939
        %v944 = vadd.f32 %v940, %v397
        %v945 = vadd.f32 %v941, %v401
        %v946 = vadd.f32 %v942, %v405
        %v947 = vadd.f32 %v943, %v409
        %v948 = vpack.c.bf16 %v934, %v934
        %949 = vmatprep.subr.bf16.mxu0 %v524
        %950 = vmatpush1.bf16.msra.mxu0 %v523
        %951 = vmatprep.subr.bf16.mxu0 %v528
        %952 = vmatpush1.bf16.msra.mxu0 %v527
        %953 = vmatprep.subr.bf16.mxu0 %v532
        %954 = vmatpush1.bf16.msra.mxu0 %v531
        %955 = vmatprep.subr.bf16.mxu0 %v536
        %956 = vmatpush1.bf16.msra.mxu0 %v535
        %957 = vmatprep.subr.bf16.mxu0 %v540
        %958 = vmatpush1.bf16.msra.mxu0 %v539
        %959 = vmatprep.subr.bf16.mxu0 %v544
        %960 = vmatpush1.bf16.msra.mxu0 %v543
        %961 = vmatprep.subr.bf16.mxu0 %v548
        %962 = vmatpush1.bf16.msra.mxu0 %v547
        %963 = vmatprep.subr.bf16.mxu0 %v552
        %964 = vmatpush1.bf16.msra.mxu0 %v551
        %965 = vmatprep.subr.bf16.mxu0 0
        %966 = vmatpush1.bf16.msra.mxu0 0
        %967 = vmatprep.subr.bf16.mxu0 0
        %968 = vmatpush1.bf16.msra.mxu0 0
        %969 = vmatprep.subr.bf16.mxu0 0
        %970 = vmatpush1.bf16.msra.mxu0 0
        %971 = vmatprep.subr.bf16.mxu0 0
        %972 = vmatpush1.bf16.msra.mxu0 0
        %973 = vmatprep.subr.bf16.mxu0 0
        %974 = vmatpush1.bf16.msra.mxu0 0
        %975 = vmatprep.subr.bf16.mxu0 0
        %976 = vmatpush1.bf16.msra.mxu0 0
        %977 = vmatprep.subr.bf16.mxu0 0
        %978 = vmatpush1.bf16.msra.mxu0 0
        %979 = vmatprep.subr.bf16.mxu0 0
        %980 = vmatpush1.bf16.msra.mxu0 0
        %981 = vmatprep.mubr.bf16.mxu0 0
        %982 = vmatmul.mubr.bf16.gmra.mrb[0].mxu0 %v948
        %v983 = vpop.f32.mrb[0].mxu0
        %v984 = vadd.f32 0.0, %v983
        %v985 = vpop.f32.mrb[0].mxu0
        %v986 = vadd.f32 0.0, %v985
        %v987 = vpop.f32.mrb[0].mxu0
        %v988 = vpop.f32.mrb[0].mxu0
        %989 = vdwg.mxu0
        %990 = vmatprep.subr.bf16.mxu0 %v526
        %991 = vmatpush1.bf16.msra.mxu0 %v525
        %992 = vmatprep.subr.bf16.mxu0 %v530
        %993 = vmatpush1.bf16.msra.mxu0 %v529
        %994 = vmatprep.subr.bf16.mxu0 %v534
        %995 = vmatpush1.bf16.msra.mxu0 %v533
        %996 = vmatprep.subr.bf16.mxu0 %v538
        %997 = vmatpush1.bf16.msra.mxu0 %v537
        %998 = vmatprep.subr.bf16.mxu0 %v542
        %999 = vmatpush1.bf16.msra.mxu0 %v541
        %1000 = vmatprep.subr.bf16.mxu0 %v546
        %1001 = vmatpush1.bf16.msra.mxu0 %v545
        %1002 = vmatprep.subr.bf16.mxu0 %v550
        %1003 = vmatpush1.bf16.msra.mxu0 %v549
        %1004 = vmatprep.subr.bf16.mxu0 %v554
        %1005 = vmatpush1.bf16.msra.mxu0 %v553
        %1006 = vmatprep.subr.bf16.mxu0 0
        %1007 = vmatpush1.bf16.msra.mxu0 0
        %1008 = vmatprep.subr.bf16.mxu0 0
        %1009 = vmatpush1.bf16.msra.mxu0 0
        %1010 = vmatprep.subr.bf16.mxu0 0
        %1011 = vmatpush1.bf16.msra.mxu0 0
        %1012 = vmatprep.subr.bf16.mxu0 0
        %1013 = vmatpush1.bf16.msra.mxu0 0
        %1014 = vmatprep.subr.bf16.mxu0 0
        %1015 = vmatpush1.bf16.msra.mxu0 0
        %1016 = vmatprep.subr.bf16.mxu0 0
        %1017 = vmatpush1.bf16.msra.mxu0 0
        %1018 = vmatprep.subr.bf16.mxu0 0
        %1019 = vmatpush1.bf16.msra.mxu0 0
        %1020 = vmatprep.subr.bf16.mxu0 0
        %1021 = vmatpush1.bf16.msra.mxu0 0
        %1022 = vmatprep.mubr.bf16.mxu0 0
        %1023 = vmatmul.mubr.bf16.gmra.mrb[0].mxu0 %v948
        %v1024 = vpop.f32.mrb[0].mxu0
        %v1025 = vadd.f32 0.0, %v1024
        %v1026 = vpop.f32.mrb[0].mxu0
        %v1027 = vadd.f32 0.0, %v1026
        %v1028 = vpop.f32.mrb[0].mxu0
        %v1029 = vpop.f32.mrb[0].mxu0
        %1030 = vdwg.mxu0
        %v1031 = vadd.f32 %v944, %v984
        %v1032 = vadd.f32 %v945, %v986
        %v1033 = vadd.f32 %v946, %v1025
        %v1034 = vadd.f32 %v947, %v1027
        %v1035 = vsub.f32 0.0, %v1031
        %v1036 = vsub.f32 0.0, %v1032
        %v1037 = vsub.f32 0.0, %v1033
        %v1038 = vmul.f32 %v1035, 1.442695
        %v1039 = vpow.pop %v1038
        %v1040 = vmul.f32 %v1036, 1.442695
        %v1041 = vpow.pop %v1040
        %v1042 = vmul.f32 %v1037, 1.442695
        %v1043 = vpow.pop %v1042
        %v1044 = vadd.f32 %v1039, 1.0
        %v1045 = vadd.f32 %v1041, 1.0
        %v1046 = vadd.f32 %v1043, 1.0
        %v1047 = vrcp.pop %v1044
        %v1048 = vrcp.pop %v1045
        %v1049 = vrcp.pop %v1046
        %v1050 = vtanh.pop %v1034
        %v1051 = vmul.f32 %v1048, %v932
        %v1052 = vmul.f32 %v1047, %v1050
        %v1053 = vadd.f32 %v1051, %v1052
        %v1054 = vtanh.pop %v1053
        %v1055 = vmul.f32 %v1049, %v1054
        %s1056 = scalar_lea.vmem %s326, 24 [#allocation4]
        %1057 = vst [vmem:[%s1056] sm:$0xff] %v1055
        %s1058 = scalar_lea.vmem %s340, 64
        %v1059 = vld [vmem:[%s1058] sm:$0xff]
        %v1060 = vld [vmem:[%s1058 + $0x8] sm:$0xff]
        %v1061 = vunpack.c.l.bf16 %v1059
        %v1062 = vunpack.c.h.bf16 %v1059
        %v1063 = vunpack.c.l.bf16 %v1060
        %v1064 = vunpack.c.h.bf16 %v1060
        %v1065 = vadd.f32 %v1061, %v397
        %v1066 = vadd.f32 %v1062, %v401
        %v1067 = vadd.f32 %v1063, %v405
        %v1068 = vadd.f32 %v1064, %v409
        %v1069 = vpack.c.bf16 %v1055, %v1055
        %1070 = vmatprep.subr.bf16.mxu0 %v524
        %1071 = vmatpush1.bf16.msra.mxu0 %v523
        %1072 = vmatprep.subr.bf16.mxu0 %v528
        %1073 = vmatpush1.bf16.msra.mxu0 %v527
        %1074 = vmatprep.subr.bf16.mxu0 %v532
        %1075 = vmatpush1.bf16.msra.mxu0 %v531
        %1076 = vmatprep.subr.bf16.mxu0 %v536
        %1077 = vmatpush1.bf16.msra.mxu0 %v535
        %1078 = vmatprep.subr.bf16.mxu0 %v540
        %1079 = vmatpush1.bf16.msra.mxu0 %v539
        %1080 = vmatprep.subr.bf16.mxu0 %v544
        %1081 = vmatpush1.bf16.msra.mxu0 %v543
        %1082 = vmatprep.subr.bf16.mxu0 %v548
        %1083 = vmatpush1.bf16.msra.mxu0 %v547
        %1084 = vmatprep.subr.bf16.mxu0 %v552
        %1085 = vmatpush1.bf16.msra.mxu0 %v551
        %1086 = vmatprep.subr.bf16.mxu0 0
        %1087 = vmatpush1.bf16.msra.mxu0 0
        %1088 = vmatprep.subr.bf16.mxu0 0
        %1089 = vmatpush1.bf16.msra.mxu0 0
        %1090 = vmatprep.subr.bf16.mxu0 0
        %1091 = vmatpush1.bf16.msra.mxu0 0
        %1092 = vmatprep.subr.bf16.mxu0 0
        %1093 = vmatpush1.bf16.msra.mxu0 0
        %1094 = vmatprep.subr.bf16.mxu0 0
        %1095 = vmatpush1.bf16.msra.mxu0 0
        %1096 = vmatprep.subr.bf16.mxu0 0
        %1097 = vmatpush1.bf16.msra.mxu0 0
        %1098 = vmatprep.subr.bf16.mxu0 0
        %1099 = vmatpush1.bf16.msra.mxu0 0
        %1100 = vmatprep.subr.bf16.mxu0 0
        %1101 = vmatpush1.bf16.msra.mxu0 0
        %1102 = vmatprep.mubr.bf16.mxu0 0
        %1103 = vmatmul.mubr.bf16.gmra.mrb[0].mxu0 %v1069
        %v1104 = vpop.f32.mrb[0].mxu0
        %v1105 = vadd.f32 0.0, %v1104
        %v1106 = vpop.f32.mrb[0].mxu0
        %v1107 = vadd.f32 0.0, %v1106
        %v1108 = vpop.f32.mrb[0].mxu0
        %v1109 = vpop.f32.mrb[0].mxu0
        %1110 = vdwg.mxu0
        %1111 = vmatprep.subr.bf16.mxu0 %v526
        %1112 = vmatpush1.bf16.msra.mxu0 %v525
        %1113 = vmatprep.subr.bf16.mxu0 %v530
        %1114 = vmatpush1.bf16.msra.mxu0 %v529
        %1115 = vmatprep.subr.bf16.mxu0 %v534
        %1116 = vmatpush1.bf16.msra.mxu0 %v533
        %1117 = vmatprep.subr.bf16.mxu0 %v538
        %1118 = vmatpush1.bf16.msra.mxu0 %v537
        %1119 = vmatprep.subr.bf16.mxu0 %v542
        %1120 = vmatpush1.bf16.msra.mxu0 %v541
        %1121 = vmatprep.subr.bf16.mxu0 %v546
        %1122 = vmatpush1.bf16.msra.mxu0 %v545
        %1123 = vmatprep.subr.bf16.mxu0 %v550
        %1124 = vmatpush1.bf16.msra.mxu0 %v549
        %1125 = vmatprep.subr.bf16.mxu0 %v554
        %1126 = vmatpush1.bf16.msra.mxu0 %v553
        %1127 = vmatprep.subr.bf16.mxu0 0
        %1128 = vmatpush1.bf16.msra.mxu0 0
        %1129 = vmatprep.subr.bf16.mxu0 0
        %1130 = vmatpush1.bf16.msra.mxu0 0
        %1131 = vmatprep.subr.bf16.mxu0 0
        %1132 = vmatpush1.bf16.msra.mxu0 0
        %1133 = vmatprep.subr.bf16.mxu0 0
        %1134 = vmatpush1.bf16.msra.mxu0 0
        %1135 = vmatprep.subr.bf16.mxu0 0
        %1136 = vmatpush1.bf16.msra.mxu0 0
        %1137 = vmatprep.subr.bf16.mxu0 0
        %1138 = vmatpush1.bf16.msra.mxu0 0
        %1139 = vmatprep.subr.bf16.mxu0 0
        %1140 = vmatpush1.bf16.msra.mxu0 0
        %1141 = vmatprep.subr.bf16.mxu0 0
        %1142 = vmatpush1.bf16.msra.mxu0 0
        %1143 = vmatprep.mubr.bf16.mxu0 0
        %1144 = vmatmul.mubr.bf16.gmra.mrb[0].mxu0 %v1069
        %v1145 = vpop.f32.mrb[0].mxu0
        %v1146 = vadd.f32 0.0, %v1145
        %v1147 = vpop.f32.mrb[0].mxu0
        %v1148 = vadd.f32 0.0, %v1147
        %v1149 = vpop.f32.mrb[0].mxu0
        %v1150 = vpop.f32.mrb[0].mxu0
        %1151 = vdwg.mxu0
        %v1152 = vadd.f32 %v1065, %v1105
        %v1153 = vadd.f32 %v1066, %v1107
        %v1154 = vadd.f32 %v1067, %v1146
        %v1155 = vadd.f32 %v1068, %v1148
        %v1156 = vsub.f32 0.0, %v1152
        %v1157 = vsub.f32 0.0, %v1153
        %v1158 = vsub.f32 0.0, %v1154
        %v1159 = vmul.f32 %v1156, 1.442695
        %v1160 = vpow.pop %v1159
        %v1161 = vmul.f32 %v1157, 1.442695
        %v1162 = vpow.pop %v1161
        %v1163 = vmul.f32 %v1158, 1.442695
        %v1164 = vpow.pop %v1163
        %v1165 = vadd.f32 %v1160, 1.0
        %v1166 = vadd.f32 %v1162, 1.0
        %v1167 = vadd.f32 %v1164, 1.0
        %v1168 = vrcp.pop %v1165
        %v1169 = vrcp.pop %v1166
        %v1170 = vrcp.pop %v1167
        %v1171 = vtanh.pop %v1155
        %v1172 = vmul.f32 %v1169, %v1053
        %v1173 = vmul.f32 %v1168, %v1171
        %v1174 = vadd.f32 %v1172, %v1173
        %v1175 = vtanh.pop %v1174
        %v1176 = vmul.f32 %v1170, %v1175
        %s1177 = scalar_lea.vmem %s326, 32 [#allocation4]
        %1178 = vst [vmem:[%s1177] sm:$0xff] %v1176
        %s1179 = scalar_lea.vmem %s340, 80
        %v1180 = vld [vmem:[%s1179] sm:$0xff]
        %v1181 = vld [vmem:[%s1179 + $0x8] sm:$0xff]
        %v1182 = vunpack.c.l.bf16 %v1180
        %v1183 = vunpack.c.h.bf16 %v1180
        %v1184 = vunpack.c.l.bf16 %v1181
        %v1185 = vunpack.c.h.bf16 %v1181
        %v1186 = vadd.f32 %v1182, %v397
        %v1187 = vadd.f32 %v1183, %v401
        %v1188 = vadd.f32 %v1184, %v405
        %v1189 = vadd.f32 %v1185, %v409
        %v1190 = vpack.c.bf16 %v1176, %v1176
        %1191 = vmatprep.subr.bf16.mxu0 %v524
        %1192 = vmatpush1.bf16.msra.mxu0 %v523
        %1193 = vmatprep.subr.bf16.mxu0 %v528
        %1194 = vmatpush1.bf16.msra.mxu0 %v527
        %1195 = vmatprep.subr.bf16.mxu0 %v532
        %1196 = vmatpush1.bf16.msra.mxu0 %v531
        %1197 = vmatprep.subr.bf16.mxu0 %v536
        %1198 = vmatpush1.bf16.msra.mxu0 %v535
        %1199 = vmatprep.subr.bf16.mxu0 %v540
        %1200 = vmatpush1.bf16.msra.mxu0 %v539
        %1201 = vmatprep.subr.bf16.mxu0 %v544
        %1202 = vmatpush1.bf16.msra.mxu0 %v543
        %1203 = vmatprep.subr.bf16.mxu0 %v548
        %1204 = vmatpush1.bf16.msra.mxu0 %v547
        %1205 = vmatprep.subr.bf16.mxu0 %v552
        %1206 = vmatpush1.bf16.msra.mxu0 %v551
        %1207 = vmatprep.subr.bf16.mxu0 0
        %1208 = vmatpush1.bf16.msra.mxu0 0
        %1209 = vmatprep.subr.bf16.mxu0 0
        %1210 = vmatpush1.bf16.msra.mxu0 0
        %1211 = vmatprep.subr.bf16.mxu0 0
        %1212 = vmatpush1.bf16.msra.mxu0 0
        %1213 = vmatprep.subr.bf16.mxu0 0
        %1214 = vmatpush1.bf16.msra.mxu0 0
        %1215 = vmatprep.subr.bf16.mxu0 0
        %1216 = vmatpush1.bf16.msra.mxu0 0
        %1217 = vmatprep.subr.bf16.mxu0 0
        %1218 = vmatpush1.bf16.msra.mxu0 0
        %1219 = vmatprep.subr.bf16.mxu0 0
        %1220 = vmatpush1.bf16.msra.mxu0 0
        %1221 = vmatprep.subr.bf16.mxu0 0
        %1222 = vmatpush1.bf16.msra.mxu0 0
        %1223 = vmatprep.mubr.bf16.mxu0 0
        %1224 = vmatmul.mubr.bf16.gmra.mrb[0].mxu0 %v1190
        %v1225 = vpop.f32.mrb[0].mxu0
        %v1226 = vadd.f32 0.0, %v1225
        %v1227 = vpop.f32.mrb[0].mxu0
        %v1228 = vadd.f32 0.0, %v1227
        %v1229 = vpop.f32.mrb[0].mxu0
        %v1230 = vpop.f32.mrb[0].mxu0
        %1231 = vdwg.mxu0
        %1232 = vmatprep.subr.bf16.mxu0 %v526
        %1233 = vmatpush1.bf16.msra.mxu0 %v525
        %1234 = vmatprep.subr.bf16.mxu0 %v530
        %1235 = vmatpush1.bf16.msra.mxu0 %v529
        %1236 = vmatprep.subr.bf16.mxu0 %v534
        %1237 = vmatpush1.bf16.msra.mxu0 %v533
        %1238 = vmatprep.subr.bf16.mxu0 %v538
        %1239 = vmatpush1.bf16.msra.mxu0 %v537
        %1240 = vmatprep.subr.bf16.mxu0 %v542
        %1241 = vmatpush1.bf16.msra.mxu0 %v541
        %1242 = vmatprep.subr.bf16.mxu0 %v546
        %1243 = vmatpush1.bf16.msra.mxu0 %v545
        %1244 = vmatprep.subr.bf16.mxu0 %v550
        %1245 = vmatpush1.bf16.msra.mxu0 %v549
        %1246 = vmatprep.subr.bf16.mxu0 %v554
        %1247 = vmatpush1.bf16.msra.mxu0 %v553
        %1248 = vmatprep.subr.bf16.mxu0 0
        %1249 = vmatpush1.bf16.msra.mxu0 0
        %1250 = vmatprep.subr.bf16.mxu0 0
        %1251 = vmatpush1.bf16.msra.mxu0 0
        %1252 = vmatprep.subr.bf16.mxu0 0
        %1253 = vmatpush1.bf16.msra.mxu0 0
        %1254 = vmatprep.subr.bf16.mxu0 0
        %1255 = vmatpush1.bf16.msra.mxu0 0
        %1256 = vmatprep.subr.bf16.mxu0 0
        %1257 = vmatpush1.bf16.msra.mxu0 0
        %1258 = vmatprep.subr.bf16.mxu0 0
        %1259 = vmatpush1.bf16.msra.mxu0 0
        %1260 = vmatprep.subr.bf16.mxu0 0
        %1261 = vmatpush1.bf16.msra.mxu0 0
        %1262 = vmatprep.subr.bf16.mxu0 0
        %1263 = vmatpush1.bf16.msra.mxu0 0
        %1264 = vmatprep.mubr.bf16.mxu0 0
        %1265 = vmatmul.mubr.bf16.gmra.mrb[0].mxu0 %v1190
        %v1266 = vpop.f32.mrb[0].mxu0
        %v1267 = vadd.f32 0.0, %v1266
        %v1268 = vpop.f32.mrb[0].mxu0
        %v1269 = vadd.f32 0.0, %v1268
        %v1270 = vpop.f32.mrb[0].mxu0
        %v1271 = vpop.f32.mrb[0].mxu0
        %1272 = vdwg.mxu0
        %v1273 = vadd.f32 %v1186, %v1226
        %v1274 = vadd.f32 %v1187, %v1228
        %v1275 = vadd.f32 %v1188, %v1267
        %v1276 = vadd.f32 %v1189, %v1269
        %v1277 = vsub.f32 0.0, %v1273
        %v1278 = vsub.f32 0.0, %v1274
        %v1279 = vsub.f32 0.0, %v1275
        %v1280 = vmul.f32 %v1277, 1.442695
        %v1281 = vpow.pop %v1280
        %v1282 = vmul.f32 %v1278, 1.442695
        %v1283 = vpow.pop %v1282
        %v1284 = vmul.f32 %v1279, 1.442695
        %v1285 = vpow.pop %v1284
        %v1286 = vadd.f32 %v1281, 1.0
        %v1287 = vadd.f32 %v1283, 1.0
        %v1288 = vadd.f32 %v1285, 1.0
        %v1289 = vrcp.pop %v1286
        %v1290 = vrcp.pop %v1287
        %v1291 = vrcp.pop %v1288
        %v1292 = vtanh.pop %v1276
        %v1293 = vmul.f32 %v1290, %v1174
        %v1294 = vmul.f32 %v1289, %v1292
        %v1295 = vadd.f32 %v1293, %v1294
        %v1296 = vtanh.pop %v1295
        %v1297 = vmul.f32 %v1291, %v1296
        %s1298 = scalar_lea.vmem %s326, 40 [#allocation4]
        %1299 = vst [vmem:[%s1298] sm:$0xff] %v1297
        %s1300 = scalar_lea.vmem %s340, 96
        %v1301 = vld [vmem:[%s1300] sm:$0xff]
        %v1302 = vld [vmem:[%s1300 + $0x8] sm:$0xff]
        %v1303 = vunpack.c.l.bf16 %v1301
        %v1304 = vunpack.c.h.bf16 %v1301
        %v1305 = vunpack.c.l.bf16 %v1302
        %v1306 = vunpack.c.h.bf16 %v1302
        %v1307 = vadd.f32 %v1303, %v397
        %v1308 = vadd.f32 %v1304, %v401
        %v1309 = vadd.f32 %v1305, %v405
        %v1310 = vadd.f32 %v1306, %v409
        %v1311 = vpack.c.bf16 %v1297, %v1297
        %1312 = vmatprep.subr.bf16.mxu0 %v524
        %1313 = vmatpush1.bf16.msra.mxu0 %v523
        %1314 = vmatprep.subr.bf16.mxu0 %v528
        %1315 = vmatpush1.bf16.msra.mxu0 %v527
        %1316 = vmatprep.subr.bf16.mxu0 %v532
        %1317 = vmatpush1.bf16.msra.mxu0 %v531
        %1318 = vmatprep.subr.bf16.mxu0 %v536
        %1319 = vmatpush1.bf16.msra.mxu0 %v535
        %1320 = vmatprep.subr.bf16.mxu0 %v540
        %1321 = vmatpush1.bf16.msra.mxu0 %v539
        %1322 = vmatprep.subr.bf16.mxu0 %v544
        %1323 = vmatpush1.bf16.msra.mxu0 %v543
        %1324 = vmatprep.subr.bf16.mxu0 %v548
        %1325 = vmatpush1.bf16.msra.mxu0 %v547
        %1326 = vmatprep.subr.bf16.mxu0 %v552
        %1327 = vmatpush1.bf16.msra.mxu0 %v551
        %1328 = vmatprep.subr.bf16.mxu0 0
        %1329 = vmatpush1.bf16.msra.mxu0 0
        %1330 = vmatprep.subr.bf16.mxu0 0
        %1331 = vmatpush1.bf16.msra.mxu0 0
        %1332 = vmatprep.subr.bf16.mxu0 0
        %1333 = vmatpush1.bf16.msra.mxu0 0
        %1334 = vmatprep.subr.bf16.mxu0 0
        %1335 = vmatpush1.bf16.msra.mxu0 0
        %1336 = vmatprep.subr.bf16.mxu0 0
        %1337 = vmatpush1.bf16.msra.mxu0 0
        %1338 = vmatprep.subr.bf16.mxu0 0
        %1339 = vmatpush1.bf16.msra.mxu0 0
        %1340 = vmatprep.subr.bf16.mxu0 0
        %1341 = vmatpush1.bf16.msra.mxu0 0
        %1342 = vmatprep.subr.bf16.mxu0 0
        %1343 = vmatpush1.bf16.msra.mxu0 0
        %1344 = vmatprep.mubr.bf16.mxu0 0
        %1345 = vmatmul.mubr.bf16.gmra.mrb[0].mxu0 %v1311
        %v1346 = vpop.f32.mrb[0].mxu0
        %v1347 = vadd.f32 0.0, %v1346
        %v1348 = vpop.f32.mrb[0].mxu0
        %v1349 = vadd.f32 0.0, %v1348
        %v1350 = vpop.f32.mrb[0].mxu0
        %v1351 = vpop.f32.mrb[0].mxu0
        %1352 = vdwg.mxu0
        %1353 = vmatprep.subr.bf16.mxu0 %v526
        %1354 = vmatpush1.bf16.msra.mxu0 %v525
        %1355 = vmatprep.subr.bf16.mxu0 %v530
        %1356 = vmatpush1.bf16.msra.mxu0 %v529
        %1357 = vmatprep.subr.bf16.mxu0 %v534
        %1358 = vmatpush1.bf16.msra.mxu0 %v533
        %1359 = vmatprep.subr.bf16.mxu0 %v538
        %1360 = vmatpush1.bf16.msra.mxu0 %v537
        %1361 = vmatprep.subr.bf16.mxu0 %v542
        %1362 = vmatpush1.bf16.msra.mxu0 %v541
        %1363 = vmatprep.subr.bf16.mxu0 %v546
        %1364 = vmatpush1.bf16.msra.mxu0 %v545
        %1365 = vmatprep.subr.bf16.mxu0 %v550
        %1366 = vmatpush1.bf16.msra.mxu0 %v549
        %1367 = vmatprep.subr.bf16.mxu0 %v554
        %1368 = vmatpush1.bf16.msra.mxu0 %v553
        %1369 = vmatprep.subr.bf16.mxu0 0
        %1370 = vmatpush1.bf16.msra.mxu0 0
        %1371 = vmatprep.subr.bf16.mxu0 0
        %1372 = vmatpush1.bf16.msra.mxu0 0
        %1373 = vmatprep.subr.bf16.mxu0 0
        %1374 = vmatpush1.bf16.msra.mxu0 0
        %1375 = vmatprep.subr.bf16.mxu0 0
        %1376 = vmatpush1.bf16.msra.mxu0 0
        %1377 = vmatprep.subr.bf16.mxu0 0
        %1378 = vmatpush1.bf16.msra.mxu0 0
        %1379 = vmatprep.subr.bf16.mxu0 0
        %1380 = vmatpush1.bf16.msra.mxu0 0
        %1381 = vmatprep.subr.bf16.mxu0 0
        %1382 = vmatpush1.bf16.msra.mxu0 0
        %1383 = vmatprep.subr.bf16.mxu0 0
        %1384 = vmatpush1.bf16.msra.mxu0 0
        %1385 = vmatprep.mubr.bf16.mxu0 0
        %1386 = vmatmul.mubr.bf16.gmra.mrb[0].mxu0 %v1311
        %v1387 = vpop.f32.mrb[0].mxu0
        %v1388 = vadd.f32 0.0, %v1387
        %v1389 = vpop.f32.mrb[0].mxu0
        %v1390 = vadd.f32 0.0, %v1389
        %v1391 = vpop.f32.mrb[0].mxu0
        %v1392 = vpop.f32.mrb[0].mxu0
        %1393 = vdwg.mxu0
        %v1394 = vadd.f32 %v1307, %v1347
        %v1395 = vadd.f32 %v1308, %v1349
        %v1396 = vadd.f32 %v1309, %v1388
        %v1397 = vadd.f32 %v1310, %v1390
        %v1398 = vsub.f32 0.0, %v1394
        %v1399 = vsub.f32 0.0, %v1395
        %v1400 = vsub.f32 0.0, %v1396
        %v1401 = vmul.f32 %v1398, 1.442695
        %v1402 = vpow.pop %v1401
        %v1403 = vmul.f32 %v1399, 1.442695
        %v1404 = vpow.pop %v1403
        %v1405 = vmul.f32 %v1400, 1.442695
        %v1406 = vpow.pop %v1405
        %v1407 = vadd.f32 %v1402, 1.0
        %v1408 = vadd.f32 %v1404, 1.0
        %v1409 = vadd.f32 %v1406, 1.0
        %v1410 = vrcp.pop %v1407
        %v1411 = vrcp.pop %v1408
        %v1412 = vrcp.pop %v1409
        %v1413 = vtanh.pop %v1397
        %v1414 = vmul.f32 %v1411, %v1295
        %v1415 = vmul.f32 %v1410, %v1413
        %v1416 = vadd.f32 %v1414, %v1415
        %v1417 = vtanh.pop %v1416
        %v1418 = vmul.f32 %v1412, %v1417
        %s1419 = scalar_lea.vmem %s326, 48 [#allocation4]
        %1420 = vst [vmem:[%s1419] sm:$0xff] %v1418
        %s1421 = scalar_lea.vmem %s340, 112
        %v1422 = vld [vmem:[%s1421] sm:$0xff]
        %v1423 = vld [vmem:[%s1421 + $0x8] sm:$0xff]
        %v1424 = vunpack.c.l.bf16 %v1422
        %v1425 = vunpack.c.h.bf16 %v1422
        %v1426 = vunpack.c.l.bf16 %v1423
        %v1427 = vunpack.c.h.bf16 %v1423
        %v1428 = vadd.f32 %v1424, %v397
        %v1429 = vadd.f32 %v1425, %v401
        %v1430 = vadd.f32 %v1426, %v405
        %v1431 = vadd.f32 %v1427, %v409
        %v1432 = vpack.c.bf16 %v1418, %v1418
        %1433 = vmatprep.subr.bf16.mxu0 %v524
        %1434 = vmatpush1.bf16.msra.mxu0 %v523
        %1435 = vmatprep.subr.bf16.mxu0 %v528
        %1436 = vmatpush1.bf16.msra.mxu0 %v527
        %1437 = vmatprep.subr.bf16.mxu0 %v532
        %1438 = vmatpush1.bf16.msra.mxu0 %v531
        %1439 = vmatprep.subr.bf16.mxu0 %v536
        %1440 = vmatpush1.bf16.msra.mxu0 %v535
        %1441 = vmatprep.subr.bf16.mxu0 %v540
        %1442 = vmatpush1.bf16.msra.mxu0 %v539
        %1443 = vmatprep.subr.bf16.mxu0 %v544
        %1444 = vmatpush1.bf16.msra.mxu0 %v543
        %1445 = vmatprep.subr.bf16.mxu0 %v548
        %1446 = vmatpush1.bf16.msra.mxu0 %v547
        %1447 = vmatprep.subr.bf16.mxu0 %v552
        %1448 = vmatpush1.bf16.msra.mxu0 %v551
        %1449 = vmatprep.subr.bf16.mxu0 0
        %1450 = vmatpush1.bf16.msra.mxu0 0
        %1451 = vmatprep.subr.bf16.mxu0 0
        %1452 = vmatpush1.bf16.msra.mxu0 0
        %1453 = vmatprep.subr.bf16.mxu0 0
        %1454 = vmatpush1.bf16.msra.mxu0 0
        %1455 = vmatprep.subr.bf16.mxu0 0
        %1456 = vmatpush1.bf16.msra.mxu0 0
        %1457 = vmatprep.subr.bf16.mxu0 0
        %1458 = vmatpush1.bf16.msra.mxu0 0
        %1459 = vmatprep.subr.bf16.mxu0 0
        %1460 = vmatpush1.bf16.msra.mxu0 0
        %1461 = vmatprep.subr.bf16.mxu0 0
        %1462 = vmatpush1.bf16.msra.mxu0 0
        %1463 = vmatprep.subr.bf16.mxu0 0
        %1464 = vmatpush1.bf16.msra.mxu0 0
        %1465 = vmatprep.mubr.bf16.mxu0 0
        %1466 = vmatmul.mubr.bf16.gmra.mrb[0].mxu0 %v1432
        %v1467 = vpop.f32.mrb[0].mxu0
        %v1468 = vadd.f32 0.0, %v1467
        %v1469 = vpop.f32.mrb[0].mxu0
        %v1470 = vadd.f32 0.0, %v1469
        %v1471 = vpop.f32.mrb[0].mxu0
        %v1472 = vpop.f32.mrb[0].mxu0
        %1473 = vdwg.mxu0
        %1474 = vmatprep.subr.bf16.mxu0 %v526
        %1475 = vmatpush1.bf16.msra.mxu0 %v525
        %1476 = vmatprep.subr.bf16.mxu0 %v530
        %1477 = vmatpush1.bf16.msra.mxu0 %v529
        %1478 = vmatprep.subr.bf16.mxu0 %v534
        %1479 = vmatpush1.bf16.msra.mxu0 %v533
        %1480 = vmatprep.subr.bf16.mxu0 %v538
        %1481 = vmatpush1.bf16.msra.mxu0 %v537
        %1482 = vmatprep.subr.bf16.mxu0 %v542
        %1483 = vmatpush1.bf16.msra.mxu0 %v541
        %1484 = vmatprep.subr.bf16.mxu0 %v546
        %1485 = vmatpush1.bf16.msra.mxu0 %v545
        %1486 = vmatprep.subr.bf16.mxu0 %v550
        %1487 = vmatpush1.bf16.msra.mxu0 %v549
        %1488 = vmatprep.subr.bf16.mxu0 %v554
        %1489 = vmatpush1.bf16.msra.mxu0 %v553
        %1490 = vmatprep.subr.bf16.mxu0 0
        %1491 = vmatpush1.bf16.msra.mxu0 0
        %1492 = vmatprep.subr.bf16.mxu0 0
        %1493 = vmatpush1.bf16.msra.mxu0 0
        %1494 = vmatprep.subr.bf16.mxu0 0
        %1495 = vmatpush1.bf16.msra.mxu0 0
        %1496 = vmatprep.subr.bf16.mxu0 0
        %1497 = vmatpush1.bf16.msra.mxu0 0
        %1498 = vmatprep.subr.bf16.mxu0 0
        %1499 = vmatpush1.bf16.msra.mxu0 0
        %1500 = vmatprep.subr.bf16.mxu0 0
        %1501 = vmatpush1.bf16.msra.mxu0 0
        %1502 = vmatprep.subr.bf16.mxu0 0
        %1503 = vmatpush1.bf16.msra.mxu0 0
        %1504 = vmatprep.subr.bf16.mxu0 0
        %1505 = vmatpush1.bf16.msra.mxu0 0
        %1506 = vmatprep.mubr.bf16.mxu0 0
        %1507 = vmatmul.mubr.bf16.gmra.mrb[0].mxu0 %v1432
        %v1508 = vpop.f32.mrb[0].mxu0
        %v1509 = vadd.f32 0.0, %v1508
        %v1510 = vpop.f32.mrb[0].mxu0
        %v1511 = vadd.f32 0.0, %v1510
        %v1512 = vpop.f32.mrb[0].mxu0
        %v1513 = vpop.f32.mrb[0].mxu0
        %1514 = vdwg.mxu0
        %v1515 = vadd.f32 %v1428, %v1468
        %v1516 = vadd.f32 %v1429, %v1470
        %v1517 = vadd.f32 %v1430, %v1509
        %v1518 = vadd.f32 %v1431, %v1511
        %v1519 = vsub.f32 0.0, %v1515
        %v1520 = vsub.f32 0.0, %v1516
        %v1521 = vsub.f32 0.0, %v1517
        %v1522 = vmul.f32 %v1519, 1.442695
        %v1523 = vpow.pop %v1522
        %v1524 = vmul.f32 %v1520, 1.442695
        %v1525 = vpow.pop %v1524
        %v1526 = vmul.f32 %v1521, 1.442695
        %v1527 = vpow.pop %v1526
        %v1528 = vadd.f32 %v1523, 1.0
        %v1529 = vadd.f32 %v1525, 1.0
        %v1530 = vadd.f32 %v1527, 1.0
        %v1531 = vrcp.pop %v1528
        %v1532 = vrcp.pop %v1529
        %v1533 = vrcp.pop %v1530
        %v1534 = vtanh.pop %v1518
        %v1535 = vmul.f32 %v1532, %v1416
        %v1536 = vmul.f32 %v1531, %v1534
        %v1537 = vadd.f32 %v1535, %v1536
        %v1538 = vtanh.pop %v1537
        %v1539 = vmul.f32 %v1533, %v1538
        %s1540 = scalar_lea.vmem %s326, 56 [#allocation4]
        %1541 = vst [vmem:[%s1540] sm:$0xff] %v1539
        %1542 = vst [vmem:[#allocation2] sm:$0xff] %v1539
        %1543 = vst [vmem:[#allocation3] sm:$0xff] %v1537
        %p1544 = scmp.eq.s32.totalorder %s28, 3
        // Predicated region
        $region45: #{lstm_forward.1} parent=39 // pred_check
          %p1545 = pneg %p1544
        $region46: #{lstm_forward.1} parent=39 // pred_check_branch
          %1547 = sbr.rel (%p1545) target = $region48
        $region47: #{lstm_forward.1} parent=39 // pred_region
          %1548 = vst [vmem:[#allocation6] sm:$0xff] %v1539
          %1549 = vst [vmem:[#allocation8] sm:$0xff] %v1537
        $region48: #{lstm_forward.1} parent=39 // pred_fallthru
          _
        %s1550 = sand.u32 %s167, 1
        %s1551 = scalar_lea.sflag [#allocation5], %s1550
        %s1552 = sand.u32 %s167, 1
        %s1553 = smul.addr %s1552, 64
        %s1554 = scalar_lea.vmem [#allocation4], %s1553
        // Predicated region
        $region49: #{lstm_forward.1} parent=39 // pred_check
          %p1555 = pneg %p177
        $region50: #{lstm_forward.1} parent=39 // pred_check_branch
          %1557 = sbr.rel (%p1555) target = $region52
        $region51: #{lstm_forward.1} parent=39 // pred_region
          %s1558 = smul.u32 8, %s28
          %s1560 = ssub.s32 1024, 1024
          %1561 = vsyncadd %s1551, %s1560
          %s1562 = sadd.s32 %s27, %s1558
          %s1563 = smul.addr %s1562, 128
          %s1564 = scalar_lea.hbm %s5, %s1563
          %s1565 = sshll.u32 %s1554, 4
          %s1566 = int_to_ptr.vmem [resolvable:$true] %s1565
          %1571 = dma.vmem_to_hbm [thread:$0]  %s1566, 1024, %s1564, %s1551, 128, 128, 8
        $region52: #{lstm_forward.1} parent=39 // pred_fallthru
          _
        // Predicated region
        $region53: #{lstm_forward.1} parent=39 // pred_check
          %p1572 = pneg %p203
        $region54: #{lstm_forward.1} parent=39 // pred_check_branch
          %1574 = sbr.rel (%p1572) target = $region56
        $region55: #{lstm_forward.1} parent=39 // pred_region
          %s1576 = ssub.s32 128, 128
          %1577 = vsyncadd [#allocation7], %s1576
          %s1578 = smul.addr %s27, 128
          %s1579 = scalar_lea.hbm %s6, %s1578
          %s1581 = sshll.u32 [#allocation6], 4
          %s1582 = int_to_ptr.vmem [resolvable:$true] %s1581
          %1584 = dma.vmem_to_hbm [thread:$0]  %s1582, 128, %s1579, [#allocation7]
        $region56: #{lstm_forward.1} parent=39 // pred_fallthru
          _
        // Predicated region
        $region57: #{lstm_forward.1} parent=39 // pred_check
          %p1585 = pneg %p229
        $region58: #{lstm_forward.1} parent=39 // pred_check_branch
          %1587 = sbr.rel (%p1585) target = $region60
        $region59: #{lstm_forward.1} parent=39 // pred_region
          %s1589 = ssub.s32 128, 128
          %1590 = vsyncadd [#allocation7], %s1589
          %s1591 = smul.addr %s27, 128
          %s1592 = scalar_lea.hbm %s7, %s1591
          %s1594 = sshll.u32 [#allocation8], 4
          %s1595 = int_to_ptr.vmem [resolvable:$true] %s1594
          %1597 = dma.vmem_to_hbm [thread:$0]  %s1595, 128, %s1592, [#allocation7]
        $region60: #{lstm_forward.1} parent=39 // pred_fallthru
          _
        // Predicated region
        $region61: #{lstm_forward.1} parent=39 // pred_check
          %p1598 = pneg %p203
        $region62: #{lstm_forward.1} parent=39 // pred_check_branch
          %1600 = sbr.rel (%p1598) target = $region64
        $region63: #{lstm_forward.1} parent=39 // pred_region
          %1601 = dma.done [#allocation7], 128
        $region64: #{lstm_forward.1} parent=39 // pred_fallthru
          _
        // Predicated region
        $region65: #{lstm_forward.1} parent=39 // pred_check
          %p1602 = pneg %p229
        $region66: #{lstm_forward.1} parent=39 // pred_check_branch
          %1604 = sbr.rel (%p1602) target = $region68
        $region67: #{lstm_forward.1} parent=39 // pred_region
          %1605 = dma.done [#allocation7], 128
        $region68: #{lstm_forward.1} parent=39 // pred_fallthru
          _
      $region40: #{lstm_forward.1} parent=5 // pred_fallthru
        _
      %p1606 = scmp.le.s32.totalorder 2, %s18
      // Predicated region
      $region69: #{lstm_forward.1} parent=5 // pred_check
        %p1607 = pneg %p1606
      $region70: #{lstm_forward.1} parent=5 // pred_check_branch
        %1609 = sbr.rel (%p1607) target = $region72
      $region71: #{lstm_forward.1} parent=5 // pred_region
        %s1610 = ssub.s32 %s18, 2
        // Predicated region
        $region73: #{lstm_forward.1} parent=71 // pred_check
          %p1611 = pneg %p183
        $region74: #{lstm_forward.1} parent=71 // pred_check_branch
          %1613 = sbr.rel (%p1611) target = $region76
        $region75: #{lstm_forward.1} parent=71 // pred_region
          %s1614 = sand.u32 %s168, 1
          %s1615 = scalar_lea.sflag [#allocation5], %s1614
          %s1616 = sand.u32 %s168, 1
          %s1617 = smul.addr %s1616, 64
          %s1618 = scalar_lea.vmem [#allocation4], %s1617
          %1619 = dma.done %s1615, 1024
        $region76: #{lstm_forward.1} parent=71 // pred_fallthru
          _
      $region72: #{lstm_forward.1} parent=5 // pred_fallthru
        _
    $region6: #{lstm_forward.1} parent=1 // loop_footer
      %s22 = sadd.s32 1, %s18
    $region7: #{lstm_forward.1} parent=1 // loop_footer_branch
      %17 = sbr.rel target = $region3
    $region8: #{lstm_forward.1} parent=1 // loop_exit
      _
    %1620 = vsyncpa [#allocation5], 1
    %s1621 = scalar_lea.sflag [#allocation5], 1
    %1622 = vsyncpa %s1621, 1
    %1623 = vsyncpa [#allocation7], 1

</llo_original>
